<compile_context>
chip_gen: v7x
topology: tpu7x:2x2x1
jax: 0.10.0
libtpu: 0.0.40
codegen_flags: <defaults>
</compile_context>

<pallas_src>
import jax
import jax.numpy as jnp
from jax import lax
from jax.experimental import pallas as pl
from jax.experimental.pallas import tpu as pltpu

EPS = 1e-5  # nn.BatchNorm2d default


def _conv3x3_bn_relu(h_spatial, pad_ref, col_ref, w_ref, b_ref, Hp, Wp):
    """3x3 'SAME' conv via im2col + one MXU matmul. BN is folded into w/b.

    h_spatial: (Hp, Wp, C) f32 value
    pad_ref:   (Hp+2, Wp+2, C) f32 VMEM scratch (1-px zero border)
    col_ref:   (Hp, Wp, 9*C) bf16 VMEM scratch (im2col patches, tap-major lanes)
    w_ref:     (9*C, Cout) bf16 (BN scale folded)
    b_ref:     (1, Cout) f32 (conv bias + BN shift folded)
    returns    (Hp*Wp, Cout) f32
    """
    C = h_spatial.shape[-1]

    # Zero only the 1-pixel border (cheap strips); the interior is fully
    # overwritten below, and the col scratch is fully rewritten, so there is
    # no full memset anywhere.
    zrow = jnp.zeros((1, Wp + 2, C), pad_ref.dtype)
    zcol = jnp.zeros((Hp + 2, 1, C), pad_ref.dtype)
    pad_ref[0:1, :, :] = zrow
    pad_ref[Hp + 1:Hp + 2, :, :] = zrow
    pad_ref[:, 0:1, :] = zcol
    pad_ref[:, Wp + 1:Wp + 2, :] = zcol
    pad_ref[1:Hp + 1, 1:Wp + 1, :] = h_spatial

    # im2col: 9 shifted band copies (lane offset t*C), no per-tap reshape.
    for dy in range(3):
        for dx in range(3):
            t = dy * 3 + dx
            col_ref[:, :, t * C:(t + 1) * C] = (
                pad_ref[dy:dy + Hp, dx:dx + Wp, :].astype(col_ref.dtype))

    # Single big-K matmul: (Hp*Wp, 9C) @ (9C, Cout), bf16 x bf16 -> f32 acc.
    col = col_ref[...].reshape(Hp * Wp, 9 * C)
    acc = jnp.dot(col, w_ref[...], preferred_element_type=jnp.float32)

    # BN already folded into w/b -> epilogue is just bias + ReLU.
    return jnp.maximum(acc + b_ref[...], 0.0)


def _contracter_kernel(x_ref, w1_ref, b1_ref, w2_ref, b2_ref, o_ref,
                       pad1_ref, col1_ref, pad2_ref, col2_ref):
    # One image (one batch element) per grid step.
    Hp, Wp, Cout = o_ref.shape[1], o_ref.shape[2], o_ref.shape[3]
    Cin = x_ref.shape[3] // 2  # input block is (1, H, Wp, 2*Cin)

    # ---- 2x2 max pool, fully in-kernel ----
    x = x_ref[0]                                   # (H, Wp, 2*Cin) f32
    x = x.reshape(Hp, 2, Wp, 2 * Cin)              # leading-dim split only
    xm = jnp.maximum(x[:, 0], x[:, 1])             # pool over H pairs
    pooled = jnp.maximum(xm[:, :, :Cin], xm[:, :, Cin:])  # pool over W pairs -> (Hp, Wp, Cin)

    # ---- conv1 + BN + ReLU ----
    h1 = _conv3x3_bn_relu(pooled, pad1_ref, col1_ref, w1_ref, b1_ref, Hp, Wp)

    # ---- conv2 + BN + ReLU ----
    h2 = _conv3x3_bn_relu(h1.reshape(Hp, Wp, Cout),
                          pad2_ref, col2_ref, w2_ref, b2_ref, Hp, Wp)

    o_ref[0] = h2.reshape(Hp, Wp, Cout).astype(o_ref.dtype)


def contracter_forward(x_nchw, params):
    (w1, b1, g1, beta1, m1, v1, w2, b2, g2, beta2, m2, v2) = params
    N, Cin, H, W = x_nchw.shape
    Cout = w1.shape[3]
    # MaxPool2d(2) floor semantics: require even spatial dims.
    assert H % 2 == 0 and W % 2 == 0, "Contracter kernel requires even H and W"
    Hp, Wp = H // 2, W // 2

    # NCHW -> NHWC (layout glue), then a *free* reshape that packs the two
    # W-pool partners onto the lane axis: (N, H, W, Cin) -> (N, H, Wp, 2*Cin).
    x = jnp.transpose(x_nchw, (0, 2, 3, 1)).astype(jnp.float32)
    x = x.reshape(N, H, Wp, 2 * Cin)

    # Fold inference-mode BatchNorm into the conv weights/bias, flatten the
    # HWIO weights to im2col layout (9*C, Cout), and cast weights to bf16.
    s1 = g1 / jnp.sqrt(v1 + EPS)
    s2 = g2 / jnp.sqrt(v2 + EPS)
    wf1 = (w1 * s1).reshape(9 * Cin, Cout).astype(jnp.bfloat16)
    wf2 = (w2 * s2).reshape(9 * Cout, Cout).astype(jnp.bfloat16)
    bb1 = ((b1 - m1) * s1 + beta1).reshape(1, Cout).astype(jnp.float32)
    bb2 = ((b2 - m2) * s2 + beta2).reshape(1, Cout).astype(jnp.float32)

    out_nhwc = pl.pallas_call(
        _contracter_kernel,
        out_shape=jax.ShapeDtypeStruct((N, Hp, Wp, Cout), jnp.float32),
        grid_spec=pltpu.PrefetchScalarGridSpec(
            num_scalar_prefetch=0,
            grid=(N,),
            in_specs=[
                pl.BlockSpec((1, H, Wp, 2 * Cin), lambda n: (n, 0, 0, 0)),
                pl.BlockSpec((9 * Cin, Cout), lambda n: (0, 0)),
                pl.BlockSpec((1, Cout), lambda n: (0, 0)),
                pl.BlockSpec((9 * Cout, Cout), lambda n: (0, 0)),
                pl.BlockSpec((1, Cout), lambda n: (0, 0)),
            ],
            out_specs=pl.BlockSpec((1, Hp, Wp, Cout), lambda n: (n, 0, 0, 0)),
            scratch_shapes=[
                pltpu.VMEM((Hp + 2, Wp + 2, Cin), jnp.float32),     # padded pooled input
                pltpu.VMEM((Hp, Wp, 9 * Cin), jnp.bfloat16),        # im2col patches, conv1
                pltpu.VMEM((Hp + 2, Wp + 2, Cout), jnp.float32),    # padded conv1 output
                pltpu.VMEM((Hp, Wp, 9 * Cout), jnp.bfloat16),       # im2col patches, conv2
            ],
        ),
        compiler_params=pltpu.CompilerParams(
            dimension_semantics=("parallel",),
            vmem_limit_bytes=32 * 1024 * 1024,
        ),
    )(x, wf1, bb1, wf2, bb2)

    return jnp.transpose(out_nhwc, (0, 3, 1, 2))  # back to NCHW


def contracter_reference(x_nchw, params):
    """Plain-JAX f32 reference (same eval-mode BN semantics)."""
    (w1, b1, g1, beta1, m1, v1, w2, b2, g2, beta2, m2, v2) = params
    x = jnp.transpose(x_nchw, (0, 2, 3, 1)).astype(jnp.float32)
    N, H, W, Cin = x.shape
    pooled = x.reshape(N, H // 2, 2, W // 2, 2, Cin).max(axis=(2, 4))

    def conv_bn_relu(h, w, b, g, beta, m, v):
        y = lax.conv_general_dilated(h, w, (1, 1), "SAME",
                                     dimension_numbers=("NHWC", "HWIO", "NHWC"))
        y = y + b
        y = (y - m) / jnp.sqrt(v + EPS) * g + beta
        return jnp.maximum(y, 0.0)

    h = conv_bn_relu(pooled, w1, b1, g1, beta1, m1, v1)
    h = conv_bn_relu(h, w2, b2, g2, beta2, m2, v2)
    return jnp.transpose(h, (0, 3, 1, 2))


if __name__ == "__main__":
    key = jax.random.PRNGKey(0)
    N, Cin, Cout, H, W = 2, 4, 8, 16, 16
    ks = jax.random.split(key, 13)

    x = jax.random.normal(ks[0], (N, Cin, H, W), jnp.float32)

    # Deterministic synthetic parameters (shapes match the PyTorch module).
    w1 = 0.2 * jax.random.normal(ks[1], (3, 3, Cin, Cout), jnp.float32)     # HWIO
    b1 = 0.1 * jax.random.normal(ks[2], (Cout,), jnp.float32)
    g1 = 1.0 + 0.1 * jax.random.normal(ks[3], (Cout,), jnp.float32)
    beta1 = 0.1 * jax.random.normal(ks[4], (Cout,), jnp.float32)
    m1 = 0.1 * jax.random.normal(ks[5], (Cout,), jnp.float32)
    v1 = 0.5 + jnp.abs(jax.random.normal(ks[6], (Cout,), jnp.float32))

    w2 = 0.2 * jax.random.normal(ks[7], (3, 3, Cout, Cout), jnp.float32)    # HWIO
    b2 = 0.1 * jax.random.normal(ks[8], (Cout,), jnp.float32)
    g2 = 1.0 + 0.1 * jax.random.normal(ks[9], (Cout,), jnp.float32)
    beta2 = 0.1 * jax.random.normal(ks[10], (Cout,), jnp.float32)
    m2 = 0.1 * jax.random.normal(ks[11], (Cout,), jnp.float32)
    v2 = 0.5 + jnp.abs(jax.random.normal(ks[12], (Cout,), jnp.float32))

    params = (w1, b1, g1, beta1, m1, v1, w2, b2, g2, beta2, m2, v2)

    out = jax.jit(contracter_forward)(x, params)
    out = jax.block_until_ready(out)

    assert out.shape == (N, Cout, H // 2, W // 2), out.shape
    ref = contracter_reference(x, params)
    max_err = float(jnp.max(jnp.abs(out - ref)))
    # Kernel uses bf16 MXU operands (f32 accumulation) -> small, bounded
    # deviation vs the pure-f32 reference.
    if not jnp.allclose(out, ref, atol=5e-2, rtol=5e-2):
        raise AssertionError(f"Pallas output mismatch vs reference, max abs err = {max_err}")

    print("KERNEL_OK")
</pallas_src>

<mosaic_0001>
module attributes {stable_mosaic.version = 11 : i64} {
  func.func @_contracter_kernel(%arg0: i32, %arg1: memref<1x16x8x8xf32, #tpu.memory_space<vmem>>, %arg2: memref<36x8xbf16, #tpu.memory_space<vmem>>, %arg3: memref<1x8xf32, #tpu.memory_space<vmem>>, %arg4: memref<72x8xbf16, #tpu.memory_space<vmem>>, %arg5: memref<1x8xf32, #tpu.memory_space<vmem>>, %arg6: memref<1x8x8x8xf32, #tpu.memory_space<vmem>>, %arg7: memref<10x10x4xf32, #tpu.memory_space<vmem>>, %arg8: memref<8x8x36xbf16, #tpu.memory_space<vmem>>, %arg9: memref<10x10x8xf32, #tpu.memory_space<vmem>>, %arg10: memref<8x8x72xbf16, #tpu.memory_space<vmem>>) attributes {dimension_semantics = [#tpu.dimension_semantics<parallel>], iteration_bounds = array<i64: 2>, scalar_prefetch = 0 : i64, scratch_operands = 4 : i64, tpu.core_type = #tpu.core_type<tc>, window_params = [{transform_indices = @transform_0, window_bounds = array<i64: 1, 16, 8, 8>}, {pipeline_mode = #tpu.pipeline_mode<synchronous>, transform_indices = @transform_1, window_bounds = array<i64: 36, 8>}, {pipeline_mode = #tpu.pipeline_mode<synchronous>, transform_indices = @transform_2, window_bounds = array<i64: 1, 8>}, {pipeline_mode = #tpu.pipeline_mode<synchronous>, transform_indices = @transform_3, window_bounds = array<i64: 72, 8>}, {pipeline_mode = #tpu.pipeline_mode<synchronous>, transform_indices = @transform_4, window_bounds = array<i64: 1, 8>}, {transform_indices = @transform_5, window_bounds = array<i64: 1, 8, 8, 8>}]} {
    %c0 = arith.constant 0 : index
    %c0_0 = arith.constant 0 : index
    %c0_1 = arith.constant 0 : index
    %c0_2 = arith.constant 0 : index
    %0 = vector.load %arg1[%c0, %c0_0, %c0_1, %c0_2] : memref<1x16x8x8xf32, #tpu.memory_space<vmem>>, vector<1x16x8x8xf32>
    %1 = vector.shape_cast %0 : vector<1x16x8x8xf32> to vector<16x8x8xf32>
    %2 = vector.shape_cast %1 : vector<16x8x8xf32> to vector<8x2x8x8xf32>
    %3 = vector.extract_strided_slice %2 {offsets = [0, 0, 0, 0], sizes = [8, 1, 8, 8], strides = [1, 1, 1, 1]} : vector<8x2x8x8xf32> to vector<8x1x8x8xf32>
    %4 = vector.shape_cast %3 : vector<8x1x8x8xf32> to vector<8x8x8xf32>
    %5 = vector.extract_strided_slice %2 {offsets = [0, 1, 0, 0], sizes = [8, 1, 8, 8], strides = [1, 1, 1, 1]} : vector<8x2x8x8xf32> to vector<8x1x8x8xf32>
    %6 = vector.shape_cast %5 : vector<8x1x8x8xf32> to vector<8x8x8xf32>
    %7 = arith.maximumf %4, %6 : vector<8x8x8xf32>
    %8 = vector.extract_strided_slice %7 {offsets = [0, 0, 0], sizes = [8, 8, 4], strides = [1, 1, 1]} : vector<8x8x8xf32> to vector<8x8x4xf32>
    %9 = vector.extract_strided_slice %7 {offsets = [0, 0, 4], sizes = [8, 8, 4], strides = [1, 1, 1]} : vector<8x8x8xf32> to vector<8x8x4xf32>
    %10 = arith.maximumf %8, %9 : vector<8x8x4xf32>
    %cst = arith.constant 0.000000e+00 : f32
    %11 = vector.broadcast %cst : f32 to vector<1x10x4xf32>
    %cst_3 = arith.constant 0.000000e+00 : f32
    %12 = vector.broadcast %cst_3 : f32 to vector<10x1x4xf32>
    %c0_4 = arith.constant 0 : index
    %c0_5 = arith.constant 0 : index
    %c0_6 = arith.constant 0 : index
    %13 = vector.load %arg7[%c0_4, %c0_5, %c0_6] : memref<10x10x4xf32, #tpu.memory_space<vmem>>, vector<1x10x4xf32>
    tpu.vector_store %arg7[%c0_4, %c0_5, %c0_6], %11 {strides = array<i32>} : memref<10x10x4xf32, #tpu.memory_space<vmem>>, vector<1x10x4xf32>,
    %c9 = arith.constant 9 : index
    %c0_7 = arith.constant 0 : index
    %c0_8 = arith.constant 0 : index
    %14 = vector.load %arg7[%c9, %c0_7, %c0_8] : memref<10x10x4xf32, #tpu.memory_space<vmem>>, vector<1x10x4xf32>
    tpu.vector_store %arg7[%c9, %c0_7, %c0_8], %11 {strides = array<i32>} : memref<10x10x4xf32, #tpu.memory_space<vmem>>, vector<1x10x4xf32>,
    %c0_9 = arith.constant 0 : index
    %c0_10 = arith.constant 0 : index
    %c0_11 = arith.constant 0 : index
    %15 = vector.load %arg7[%c0_9, %c0_10, %c0_11] : memref<10x10x4xf32, #tpu.memory_space<vmem>>, vector<10x1x4xf32>
    tpu.vector_store %arg7[%c0_9, %c0_10, %c0_11], %12 {strides = array<i32>} : memref<10x10x4xf32, #tpu.memory_space<vmem>>, vector<10x1x4xf32>,
    %c0_12 = arith.constant 0 : index
    %c9_13 = arith.constant 9 : index
    %c0_14 = arith.constant 0 : index
    %16 = vector.load %arg7[%c0_12, %c9_13, %c0_14] : memref<10x10x4xf32, #tpu.memory_space<vmem>>, vector<10x1x4xf32>
    tpu.vector_store %arg7[%c0_12, %c9_13, %c0_14], %12 {strides = array<i32>} : memref<10x10x4xf32, #tpu.memory_space<vmem>>, vector<10x1x4xf32>,
    %c1 = arith.constant 1 : index
    %c1_15 = arith.constant 1 : index
    %c0_16 = arith.constant 0 : index
    %17 = vector.load %arg7[%c1, %c1_15, %c0_16] : memref<10x10x4xf32, #tpu.memory_space<vmem>>, vector<8x8x4xf32>
    tpu.vector_store %arg7[%c1, %c1_15, %c0_16], %10 {strides = array<i32>} : memref<10x10x4xf32, #tpu.memory_space<vmem>>, vector<8x8x4xf32>,
    %c0_17 = arith.constant 0 : index
    %c0_18 = arith.constant 0 : index
    %c0_19 = arith.constant 0 : index
    %18 = vector.load %arg7[%c0_17, %c0_18, %c0_19] : memref<10x10x4xf32, #tpu.memory_space<vmem>>, vector<8x8x4xf32>
    %19 = arith.truncf %18 : vector<8x8x4xf32> to vector<8x8x4xbf16>
    %c0_20 = arith.constant 0 : index
    %c0_21 = arith.constant 0 : index
    %c0_22 = arith.constant 0 : index
    %20 = vector.load %arg8[%c0_20, %c0_21, %c0_22] : memref<8x8x36xbf16, #tpu.memory_space<vmem>>, vector<8x8x4xbf16>
    tpu.vector_store %arg8[%c0_20, %c0_21, %c0_22], %19 {strides = array<i32>} : memref<8x8x36xbf16, #tpu.memory_space<vmem>>, vector<8x8x4xbf16>,
    %c0_23 = arith.constant 0 : index
    %c1_24 = arith.constant 1 : index
    %c0_25 = arith.constant 0 : index
    %21 = vector.load %arg7[%c0_23, %c1_24, %c0_25] : memref<10x10x4xf32, #tpu.memory_space<vmem>>, vector<8x8x4xf32>
    %22 = arith.truncf %21 : vector<8x8x4xf32> to vector<8x8x4xbf16>
    %c0_26 = arith.constant 0 : index
    %c0_27 = arith.constant 0 : index
    %c4 = arith.constant 4 : index
    %23 = vector.load %arg8[%c0_26, %c0_27, %c4] : memref<8x8x36xbf16, #tpu.memory_space<vmem>>, vector<8x8x4xbf16>
    tpu.vector_store %arg8[%c0_26, %c0_27, %c4], %22 {strides = array<i32>} : memref<8x8x36xbf16, #tpu.memory_space<vmem>>, vector<8x8x4xbf16>,
    %c0_28 = arith.constant 0 : index
    %c2 = arith.constant 2 : index
    %c0_29 = arith.constant 0 : index
    %24 = vector.load %arg7[%c0_28, %c2, %c0_29] : memref<10x10x4xf32, #tpu.memory_space<vmem>>, vector<8x8x4xf32>
    %25 = arith.truncf %24 : vector<8x8x4xf32> to vector<8x8x4xbf16>
    %c0_30 = arith.constant 0 : index
    %c0_31 = arith.constant 0 : index
    %c8 = arith.constant 8 : index
    %26 = vector.load %arg8[%c0_30, %c0_31, %c8] : memref<8x8x36xbf16, #tpu.memory_space<vmem>>, vector<8x8x4xbf16>
    tpu.vector_store %arg8[%c0_30, %c0_31, %c8], %25 {strides = array<i32>} : memref<8x8x36xbf16, #tpu.memory_space<vmem>>, vector<8x8x4xbf16>,
    %c1_32 = arith.constant 1 : index
    %c0_33 = arith.constant 0 : index
    %c0_34 = arith.constant 0 : index
    %27 = vector.load %arg7[%c1_32, %c0_33, %c0_34] : memref<10x10x4xf32, #tpu.memory_space<vmem>>, vector<8x8x4xf32>
    %28 = arith.truncf %27 : vector<8x8x4xf32> to vector<8x8x4xbf16>
    %c0_35 = arith.constant 0 : index
    %c0_36 = arith.constant 0 : index
    %c12 = arith.constant 12 : index
    %29 = vector.load %arg8[%c0_35, %c0_36, %c12] : memref<8x8x36xbf16, #tpu.memory_space<vmem>>, vector<8x8x4xbf16>
    tpu.vector_store %arg8[%c0_35, %c0_36, %c12], %28 {strides = array<i32>} : memref<8x8x36xbf16, #tpu.memory_space<vmem>>, vector<8x8x4xbf16>,
    %c1_37 = arith.constant 1 : index
    %c1_38 = arith.constant 1 : index
    %c0_39 = arith.constant 0 : index
    %30 = vector.load %arg7[%c1_37, %c1_38, %c0_39] : memref<10x10x4xf32, #tpu.memory_space<vmem>>, vector<8x8x4xf32>
    %31 = arith.truncf %30 : vector<8x8x4xf32> to vector<8x8x4xbf16>
    %c0_40 = arith.constant 0 : index
    %c0_41 = arith.constant 0 : index
    %c16 = arith.constant 16 : index
    %32 = vector.load %arg8[%c0_40, %c0_41, %c16] : memref<8x8x36xbf16, #tpu.memory_space<vmem>>, vector<8x8x4xbf16>
    tpu.vector_store %arg8[%c0_40, %c0_41, %c16], %31 {strides = array<i32>} : memref<8x8x36xbf16, #tpu.memory_space<vmem>>, vector<8x8x4xbf16>,
    %c1_42 = arith.constant 1 : index
    %c2_43 = arith.constant 2 : index
    %c0_44 = arith.constant 0 : index
    %33 = vector.load %arg7[%c1_42, %c2_43, %c0_44] : memref<10x10x4xf32, #tpu.memory_space<vmem>>, vector<8x8x4xf32>
    %34 = arith.truncf %33 : vector<8x8x4xf32> to vector<8x8x4xbf16>
    %c0_45 = arith.constant 0 : index
    %c0_46 = arith.constant 0 : index
    %c20 = arith.constant 20 : index
    %35 = vector.load %arg8[%c0_45, %c0_46, %c20] : memref<8x8x36xbf16, #tpu.memory_space<vmem>>, vector<8x8x4xbf16>
    tpu.vector_store %arg8[%c0_45, %c0_46, %c20], %34 {strides = array<i32>} : memref<8x8x36xbf16, #tpu.memory_space<vmem>>, vector<8x8x4xbf16>,
    %c2_47 = arith.constant 2 : index
    %c0_48 = arith.constant 0 : index
    %c0_49 = arith.constant 0 : index
    %36 = vector.load %arg7[%c2_47, %c0_48, %c0_49] : memref<10x10x4xf32, #tpu.memory_space<vmem>>, vector<8x8x4xf32>
    %37 = arith.truncf %36 : vector<8x8x4xf32> to vector<8x8x4xbf16>
    %c0_50 = arith.constant 0 : index
    %c0_51 = arith.constant 0 : index
    %c24 = arith.constant 24 : index
    %38 = vector.load %arg8[%c0_50, %c0_51, %c24] : memref<8x8x36xbf16, #tpu.memory_space<vmem>>, vector<8x8x4xbf16>
    tpu.vector_store %arg8[%c0_50, %c0_51, %c24], %37 {strides = array<i32>} : memref<8x8x36xbf16, #tpu.memory_space<vmem>>, vector<8x8x4xbf16>,
    %c2_52 = arith.constant 2 : index
    %c1_53 = arith.constant 1 : index
    %c0_54 = arith.constant 0 : index
    %39 = vector.load %arg7[%c2_52, %c1_53, %c0_54] : memref<10x10x4xf32, #tpu.memory_space<vmem>>, vector<8x8x4xf32>
    %40 = arith.truncf %39 : vector<8x8x4xf32> to vector<8x8x4xbf16>
    %c0_55 = arith.constant 0 : index
    %c0_56 = arith.constant 0 : index
    %c28 = arith.constant 28 : index
    %41 = vector.load %arg8[%c0_55, %c0_56, %c28] : memref<8x8x36xbf16, #tpu.memory_space<vmem>>, vector<8x8x4xbf16>
    tpu.vector_store %arg8[%c0_55, %c0_56, %c28], %40 {strides = array<i32>} : memref<8x8x36xbf16, #tpu.memory_space<vmem>>, vector<8x8x4xbf16>,
    %c2_57 = arith.constant 2 : index
    %c2_58 = arith.constant 2 : index
    %c0_59 = arith.constant 0 : index
    %42 = vector.load %arg7[%c2_57, %c2_58, %c0_59] : memref<10x10x4xf32, #tpu.memory_space<vmem>>, vector<8x8x4xf32>
    %43 = arith.truncf %42 : vector<8x8x4xf32> to vector<8x8x4xbf16>
    %c0_60 = arith.constant 0 : index
    %c0_61 = arith.constant 0 : index
    %c32 = arith.constant 32 : index
    %44 = vector.load %arg8[%c0_60, %c0_61, %c32] : memref<8x8x36xbf16, #tpu.memory_space<vmem>>, vector<8x8x4xbf16>
    tpu.vector_store %arg8[%c0_60, %c0_61, %c32], %43 {strides = array<i32>} : memref<8x8x36xbf16, #tpu.memory_space<vmem>>, vector<8x8x4xbf16>,
    %c0_62 = arith.constant 0 : index
    %c0_63 = arith.constant 0 : index
    %c0_64 = arith.constant 0 : index
    %45 = vector.load %arg8[%c0_62, %c0_63, %c0_64] : memref<8x8x36xbf16, #tpu.memory_space<vmem>>, vector<8x8x36xbf16>
    %46 = vector.shape_cast %45 : vector<8x8x36xbf16> to vector<64x36xbf16>
    %c0_65 = arith.constant 0 : index
    %c0_66 = arith.constant 0 : index
    %47 = vector.load %arg2[%c0_65, %c0_66] : memref<36x8xbf16, #tpu.memory_space<vmem>>, vector<36x8xbf16>
    %cst_67 = arith.constant dense<0.000000e+00> : vector<64x8xf32>
    %48 = tpu.matmul %46, %47, %cst_67 {dimension_numbers = #tpu.dot_dimension_numbers<[1], [0], [0], [1], [0, 0, 1, 1], [], []>} : vector<64x36xbf16>, vector<36x8xbf16>, vector<64x8xf32> -> vector<64x8xf32>
    %c0_68 = arith.constant 0 : index
    %c0_69 = arith.constant 0 : index
    %49 = vector.load %arg3[%c0_68, %c0_69] : memref<1x8xf32, #tpu.memory_space<vmem>>, vector<1x8xf32>
    %50 = vector.broadcast %49 : vector<1x8xf32> to vector<64x8xf32>
    %51 = arith.addf %48, %50 : vector<64x8xf32>
    %cst_70 = arith.constant 0.000000e+00 : f32
    %52 = vector.broadcast %cst_70 : f32 to vector<64x8xf32>
    %53 = arith.maximumf %51, %52 : vector<64x8xf32>
    %54 = vector.shape_cast %53 : vector<64x8xf32> to vector<8x8x8xf32>
    %cst_71 = arith.constant 0.000000e+00 : f32
    %55 = vector.broadcast %cst_71 : f32 to vector<1x10x8xf32>
    %cst_72 = arith.constant 0.000000e+00 : f32
    %56 = vector.broadcast %cst_72 : f32 to vector<10x1x8xf32>
    %c0_73 = arith.constant 0 : index
    %c0_74 = arith.constant 0 : index
    %c0_75 = arith.constant 0 : index
    %57 = vector.load %arg9[%c0_73, %c0_74, %c0_75] : memref<10x10x8xf32, #tpu.memory_space<vmem>>, vector<1x10x8xf32>
    tpu.vector_store %arg9[%c0_73, %c0_74, %c0_75], %55 {strides = array<i32>} : memref<10x10x8xf32, #tpu.memory_space<vmem>>, vector<1x10x8xf32>,
    %c9_76 = arith.constant 9 : index
    %c0_77 = arith.constant 0 : index
    %c0_78 = arith.constant 0 : index
    %58 = vector.load %arg9[%c9_76, %c0_77, %c0_78] : memref<10x10x8xf32, #tpu.memory_space<vmem>>, vector<1x10x8xf32>
    tpu.vector_store %arg9[%c9_76, %c0_77, %c0_78], %55 {strides = array<i32>} : memref<10x10x8xf32, #tpu.memory_space<vmem>>, vector<1x10x8xf32>,
    %c0_79 = arith.constant 0 : index
    %c0_80 = arith.constant 0 : index
    %c0_81 = arith.constant 0 : index
    %59 = vector.load %arg9[%c0_79, %c0_80, %c0_81] : memref<10x10x8xf32, #tpu.memory_space<vmem>>, vector<10x1x8xf32>
    tpu.vector_store %arg9[%c0_79, %c0_80, %c0_81], %56 {strides = array<i32>} : memref<10x10x8xf32, #tpu.memory_space<vmem>>, vector<10x1x8xf32>,
    %c0_82 = arith.constant 0 : index
    %c9_83 = arith.constant 9 : index
    %c0_84 = arith.constant 0 : index
    %60 = vector.load %arg9[%c0_82, %c9_83, %c0_84] : memref<10x10x8xf32, #tpu.memory_space<vmem>>, vector<10x1x8xf32>
    tpu.vector_store %arg9[%c0_82, %c9_83, %c0_84], %56 {strides = array<i32>} : memref<10x10x8xf32, #tpu.memory_space<vmem>>, vector<10x1x8xf32>,
    %c1_85 = arith.constant 1 : index
    %c1_86 = arith.constant 1 : index
    %c0_87 = arith.constant 0 : index
    %61 = vector.load %arg9[%c1_85, %c1_86, %c0_87] : memref<10x10x8xf32, #tpu.memory_space<vmem>>, vector<8x8x8xf32>
    tpu.vector_store %arg9[%c1_85, %c1_86, %c0_87], %54 {strides = array<i32>} : memref<10x10x8xf32, #tpu.memory_space<vmem>>, vector<8x8x8xf32>,
    %c0_88 = arith.constant 0 : index
    %c0_89 = arith.constant 0 : index
    %c0_90 = arith.constant 0 : index
    %62 = vector.load %arg9[%c0_88, %c0_89, %c0_90] : memref<10x10x8xf32, #tpu.memory_space<vmem>>, vector<8x8x8xf32>
    %63 = arith.truncf %62 : vector<8x8x8xf32> to vector<8x8x8xbf16>
    %c0_91 = arith.constant 0 : index
    %c0_92 = arith.constant 0 : index
    %c0_93 = arith.constant 0 : index
    %64 = vector.load %arg10[%c0_91, %c0_92, %c0_93] : memref<8x8x72xbf16, #tpu.memory_space<vmem>>, vector<8x8x8xbf16>
    tpu.vector_store %arg10[%c0_91, %c0_92, %c0_93], %63 {strides = array<i32>} : memref<8x8x72xbf16, #tpu.memory_space<vmem>>, vector<8x8x8xbf16>,
    %c0_94 = arith.constant 0 : index
    %c1_95 = arith.constant 1 : index
    %c0_96 = arith.constant 0 : index
    %65 = vector.load %arg9[%c0_94, %c1_95, %c0_96] : memref<10x10x8xf32, #tpu.memory_space<vmem>>, vector<8x8x8xf32>
    %66 = arith.truncf %65 : vector<8x8x8xf32> to vector<8x8x8xbf16>
    %c0_97 = arith.constant 0 : index
    %c0_98 = arith.constant 0 : index
    %c8_99 = arith.constant 8 : index
    %67 = vector.load %arg10[%c0_97, %c0_98, %c8_99] : memref<8x8x72xbf16, #tpu.memory_space<vmem>>, vector<8x8x8xbf16>
    tpu.vector_store %arg10[%c0_97, %c0_98, %c8_99], %66 {strides = array<i32>} : memref<8x8x72xbf16, #tpu.memory_space<vmem>>, vector<8x8x8xbf16>,
    %c0_100 = arith.constant 0 : index
    %c2_101 = arith.constant 2 : index
    %c0_102 = arith.constant 0 : index
    %68 = vector.load %arg9[%c0_100, %c2_101, %c0_102] : memref<10x10x8xf32, #tpu.memory_space<vmem>>, vector<8x8x8xf32>
    %69 = arith.truncf %68 : vector<8x8x8xf32> to vector<8x8x8xbf16>
    %c0_103 = arith.constant 0 : index
    %c0_104 = arith.constant 0 : index
    %c16_105 = arith.constant 16 : index
    %70 = vector.load %arg10[%c0_103, %c0_104, %c16_105] : memref<8x8x72xbf16, #tpu.memory_space<vmem>>, vector<8x8x8xbf16>
    tpu.vector_store %arg10[%c0_103, %c0_104, %c16_105], %69 {strides = array<i32>} : memref<8x8x72xbf16, #tpu.memory_space<vmem>>, vector<8x8x8xbf16>,
    %c1_106 = arith.constant 1 : index
    %c0_107 = arith.constant 0 : index
    %c0_108 = arith.constant 0 : index
    %71 = vector.load %arg9[%c1_106, %c0_107, %c0_108] : memref<10x10x8xf32, #tpu.memory_space<vmem>>, vector<8x8x8xf32>
    %72 = arith.truncf %71 : vector<8x8x8xf32> to vector<8x8x8xbf16>
    %c0_109 = arith.constant 0 : index
    %c0_110 = arith.constant 0 : index
    %c24_111 = arith.constant 24 : index
    %73 = vector.load %arg10[%c0_109, %c0_110, %c24_111] : memref<8x8x72xbf16, #tpu.memory_space<vmem>>, vector<8x8x8xbf16>
    tpu.vector_store %arg10[%c0_109, %c0_110, %c24_111], %72 {strides = array<i32>} : memref<8x8x72xbf16, #tpu.memory_space<vmem>>, vector<8x8x8xbf16>,
    %c1_112 = arith.constant 1 : index
    %c1_113 = arith.constant 1 : index
    %c0_114 = arith.constant 0 : index
    %74 = vector.load %arg9[%c1_112, %c1_113, %c0_114] : memref<10x10x8xf32, #tpu.memory_space<vmem>>, vector<8x8x8xf32>
    %75 = arith.truncf %74 : vector<8x8x8xf32> to vector<8x8x8xbf16>
    %c0_115 = arith.constant 0 : index
    %c0_116 = arith.constant 0 : index
    %c32_117 = arith.constant 32 : index
    %76 = vector.load %arg10[%c0_115, %c0_116, %c32_117] : memref<8x8x72xbf16, #tpu.memory_space<vmem>>, vector<8x8x8xbf16>
    tpu.vector_store %arg10[%c0_115, %c0_116, %c32_117], %75 {strides = array<i32>} : memref<8x8x72xbf16, #tpu.memory_space<vmem>>, vector<8x8x8xbf16>,
    %c1_118 = arith.constant 1 : index
    %c2_119 = arith.constant 2 : index
    %c0_120 = arith.constant 0 : index
    %77 = vector.load %arg9[%c1_118, %c2_119, %c0_120] : memref<10x10x8xf32, #tpu.memory_space<vmem>>, vector<8x8x8xf32>
    %78 = arith.truncf %77 : vector<8x8x8xf32> to vector<8x8x8xbf16>
    %c0_121 = arith.constant 0 : index
    %c0_122 = arith.constant 0 : index
    %c40 = arith.constant 40 : index
    %79 = vector.load %arg10[%c0_121, %c0_122, %c40] : memref<8x8x72xbf16, #tpu.memory_space<vmem>>, vector<8x8x8xbf16>
    tpu.vector_store %arg10[%c0_121, %c0_122, %c40], %78 {strides = array<i32>} : memref<8x8x72xbf16, #tpu.memory_space<vmem>>, vector<8x8x8xbf16>,
    %c2_123 = arith.constant 2 : index
    %c0_124 = arith.constant 0 : index
    %c0_125 = arith.constant 0 : index
    %80 = vector.load %arg9[%c2_123, %c0_124, %c0_125] : memref<10x10x8xf32, #tpu.memory_space<vmem>>, vector<8x8x8xf32>
    %81 = arith.truncf %80 : vector<8x8x8xf32> to vector<8x8x8xbf16>
    %c0_126 = arith.constant 0 : index
    %c0_127 = arith.constant 0 : index
    %c48 = arith.constant 48 : index
    %82 = vector.load %arg10[%c0_126, %c0_127, %c48] : memref<8x8x72xbf16, #tpu.memory_space<vmem>>, vector<8x8x8xbf16>
    tpu.vector_store %arg10[%c0_126, %c0_127, %c48], %81 {strides = array<i32>} : memref<8x8x72xbf16, #tpu.memory_space<vmem>>, vector<8x8x8xbf16>,
    %c2_128 = arith.constant 2 : index
    %c1_129 = arith.constant 1 : index
    %c0_130 = arith.constant 0 : index
    %83 = vector.load %arg9[%c2_128, %c1_129, %c0_130] : memref<10x10x8xf32, #tpu.memory_space<vmem>>, vector<8x8x8xf32>
    %84 = arith.truncf %83 : vector<8x8x8xf32> to vector<8x8x8xbf16>
    %c0_131 = arith.constant 0 : index
    %c0_132 = arith.constant 0 : index
    %c56 = arith.constant 56 : index
    %85 = vector.load %arg10[%c0_131, %c0_132, %c56] : memref<8x8x72xbf16, #tpu.memory_space<vmem>>, vector<8x8x8xbf16>
    tpu.vector_store %arg10[%c0_131, %c0_132, %c56], %84 {strides = array<i32>} : memref<8x8x72xbf16, #tpu.memory_space<vmem>>, vector<8x8x8xbf16>,
    %c2_133 = arith.constant 2 : index
    %c2_134 = arith.constant 2 : index
    %c0_135 = arith.constant 0 : index
    %86 = vector.load %arg9[%c2_133, %c2_134, %c0_135] : memref<10x10x8xf32, #tpu.memory_space<vmem>>, vector<8x8x8xf32>
    %87 = arith.truncf %86 : vector<8x8x8xf32> to vector<8x8x8xbf16>
    %c0_136 = arith.constant 0 : index
    %c0_137 = arith.constant 0 : index
    %c64 = arith.constant 64 : index
    %88 = vector.load %arg10[%c0_136, %c0_137, %c64] : memref<8x8x72xbf16, #tpu.memory_space<vmem>>, vector<8x8x8xbf16>
    tpu.vector_store %arg10[%c0_136, %c0_137, %c64], %87 {strides = array<i32>} : memref<8x8x72xbf16, #tpu.memory_space<vmem>>, vector<8x8x8xbf16>,
    %c0_138 = arith.constant 0 : index
    %c0_139 = arith.constant 0 : index
    %c0_140 = arith.constant 0 : index
    %89 = vector.load %arg10[%c0_138, %c0_139, %c0_140] : memref<8x8x72xbf16, #tpu.memory_space<vmem>>, vector<8x8x72xbf16>
    %90 = vector.shape_cast %89 : vector<8x8x72xbf16> to vector<64x72xbf16>
    %c0_141 = arith.constant 0 : index
    %c0_142 = arith.constant 0 : index
    %91 = vector.load %arg4[%c0_141, %c0_142] : memref<72x8xbf16, #tpu.memory_space<vmem>>, vector<72x8xbf16>
    %cst_143 = arith.constant dense<0.000000e+00> : vector<64x8xf32>
    %92 = tpu.matmul %90, %91, %cst_143 {dimension_numbers = #tpu.dot_dimension_numbers<[1], [0], [0], [1], [0, 0, 1, 1], [], []>} : vector<64x72xbf16>, vector<72x8xbf16>, vector<64x8xf32> -> vector<64x8xf32>
    %c0_144 = arith.constant 0 : index
    %c0_145 = arith.constant 0 : index
    %93 = vector.load %arg5[%c0_144, %c0_145] : memref<1x8xf32, #tpu.memory_space<vmem>>, vector<1x8xf32>
    %94 = vector.broadcast %93 : vector<1x8xf32> to vector<64x8xf32>
    %95 = arith.addf %92, %94 : vector<64x8xf32>
    %cst_146 = arith.constant 0.000000e+00 : f32
    %96 = vector.broadcast %cst_146 : f32 to vector<64x8xf32>
    %97 = arith.maximumf %95, %96 : vector<64x8xf32>
    %98 = vector.shape_cast %97 : vector<64x8xf32> to vector<8x8x8xf32>
    %c0_147 = arith.constant 0 : index
    %c0_148 = arith.constant 0 : index
    %c0_149 = arith.constant 0 : index
    %c0_150 = arith.constant 0 : index
    %99 = vector.load %arg6[%c0_147, %c0_148, %c0_149, %c0_150] : memref<1x8x8x8xf32, #tpu.memory_space<vmem>>, vector<1x8x8x8xf32>
    %100 = vector.shape_cast %99 : vector<1x8x8x8xf32> to vector<8x8x8xf32>
    %101 = vector.shape_cast %98 : vector<8x8x8xf32> to vector<1x8x8x8xf32>
    tpu.vector_store %arg6[%c0_147, %c0_148, %c0_149, %c0_150], %101 {strides = array<i32>} : memref<1x8x8x8xf32, #tpu.memory_space<vmem>>, vector<1x8x8x8xf32>,
    return
  }
  func.func @transform_0(%arg0: i32) -> (i32, i32, i32, i32) {
    %c0_i32 = arith.constant 0 : i32
    %c0_i32_0 = arith.constant 0 : i32
    %c0_i32_1 = arith.constant 0 : i32
    %c0_i32_2 = arith.constant 0 : i32
    return %arg0, %c0_i32, %c0_i32_0, %c0_i32_1 : i32, i32, i32, i32
  }
  func.func @transform_1(%arg0: i32) -> (i32, i32) {
    %c0_i32 = arith.constant 0 : i32
    %c0_i32_0 = arith.constant 0 : i32
    %c0_i32_1 = arith.constant 0 : i32
    return %c0_i32, %c0_i32_0 : i32, i32
  }
  func.func @transform_2(%arg0: i32) -> (i32, i32) {
    %c0_i32 = arith.constant 0 : i32
    %c0_i32_0 = arith.constant 0 : i32
    %c0_i32_1 = arith.constant 0 : i32
    return %c0_i32, %c0_i32_0 : i32, i32
  }
  func.func @transform_3(%arg0: i32) -> (i32, i32) {
    %c0_i32 = arith.constant 0 : i32
    %c0_i32_0 = arith.constant 0 : i32
    %c0_i32_1 = arith.constant 0 : i32
    return %c0_i32, %c0_i32_0 : i32, i32
  }
  func.func @transform_4(%arg0: i32) -> (i32, i32) {
    %c0_i32 = arith.constant 0 : i32
    %c0_i32_0 = arith.constant 0 : i32
    %c0_i32_1 = arith.constant 0 : i32
    return %c0_i32, %c0_i32_0 : i32, i32
  }
  func.func @transform_5(%arg0: i32) -> (i32, i32, i32, i32) {
    %c0_i32 = arith.constant 0 : i32
    %c0_i32_0 = arith.constant 0 : i32
    %c0_i32_1 = arith.constant 0 : i32
    %c0_i32_2 = arith.constant 0 : i32
    return %arg0, %c0_i32, %c0_i32_0, %c0_i32_1 : i32, i32, i32, i32
  }
}

</mosaic_0001>

<llo_original>
// kernel: contracter_forward.1
$region0: #{contracter_forward.1}
  #allocation0 [shape = 'u32[]', space=smem, size = 0x4, offset = 0x4, fixed_abs, tag = 'smem constant byte address 0x4 - core index']
  #allocation1 [shape = 'u32[144,128]{1,0:T(1,128)}', space=vmem, size = 0x12000, scoped, tag = 'internal scratch']
  #allocation2 [shape = 'f32[10,10,4]{2,1,0:T(8,128)}', space=vmem, size = 0x14000, scoped, tag = 'scratch operand']
  #allocation3 [shape = 'bf16[8,8,36]{2,1,0:T(8,128)(2,1)}', space=vmem, size = 0x4000, scoped, tag = 'scratch operand']
  #allocation4 [shape = 'f32[10,10,8]{2,1,0:T(8,128)}', space=vmem, size = 0x14000, scoped, tag = 'scratch operand']
  #allocation5 [shape = 'bf16[8,8,72]{2,1,0:T(8,128)(2,1)}', space=vmem, size = 0x4000, scoped, tag = 'scratch operand']
  %s0 = inlined_call_operand.vmem [shape: f32[2,16,8,8], index: 0, kind: input, shape index: {}]
  %s1 = inlined_call_operand.vmem [shape: bf16[36,8], index: 1, kind: input, shape index: {}]
  %s2 = inlined_call_operand.vmem [shape: f32[1,8], index: 2, kind: input, shape index: {}]
  %s3 = inlined_call_operand.vmem [shape: bf16[72,8], index: 3, kind: input, shape index: {}]
  %s4 = inlined_call_operand.vmem [shape: f32[1,8], index: 4, kind: input, shape index: {}]
  %s5 = inlined_call_operand.vmem [shape: f32[2,8,8,8], index: 5, kind: output, shape index: {}]
  %s6 = sld [smem:[#allocation0]]
  $region53: #{contracter_forward.1} parent=0
    _
  %s8 = ssub.s32 1, %s6
  %s9 = scalar_select 0, %s8, %s6
  loop: start=0, step=1, limit=4
  $region2: #{contracter_forward.1} parent=0 // loop_pre_header
    _
  $region3: #{contracter_forward.1} parent=0 // loop_header
    %s11 = sphi 0, %s15
    %p12 = scmp.ge.s32.totalorder %s11, 4
    %s21 = sphi 0, %s23
    %s24 = sphi 0, %s21
    %s25 = sphi 0, %s24
    %s41 = sphi 0, %s25
    %s45 = sphi 0, %s45
    %s47 = sphi 0, %s45
    %s48 = sphi 0, %s47
    %s62 = sphi 0, %s48
    %s66 = sphi 0, %s66
    %s68 = sphi 0, %s66
    %s69 = sphi 0, %s68
    %s83 = sphi 0, %s69
    %s87 = sphi 0, %s87
    %s89 = sphi 0, %s87
    %s90 = sphi 0, %s89
    %s104 = sphi 0, %s90
    %s108 = sphi 0, %s108
    %s110 = sphi 0, %s108
    %s111 = sphi 0, %s110
    %s125 = sphi 0, %s111
    %s131 = sphi 0, %s133
    %s134 = sphi 0, %s131
    %s135 = sphi 0, %s134
    %s151 = sphi 0, %s135
  $region4: #{contracter_forward.1} parent=0 // loop_header_branch
    %14 = sbr.rel (%p12) target = $region8
  $region5: #{contracter_forward.1} parent=0 // loop_body
    %s16 = ssub.s32 %s11, 1
    %s17 = ssub.s32 %s11, 2
    %s18 = sadd.s32 %s11, 1
    %s19 = ssub.s32 %s11, %s18
    %p20 = scmp.eq.s32.totalorder %s19, 0
    %s22 = sadd.s32 %s21, 1
    %s23 = scalar_select %p20, %s21, %s22
    %p26 = pneg %p20
    %p27 = scmp.eq.s32.totalorder %s11, 1
    %p28 = por %p26, %p27
    %p29 = scmp.ne.s32.totalorder %s21, %s24
    %p30 = scmp.eq.s32.totalorder %s11, 0
    %p31 = por %p29, %p30
    %p32 = scmp.ne.s32.totalorder %s21, %s24
    %p33 = scmp.eq.s32.totalorder %s16, 1
    %p34 = por %p32, %p33
    %p35 = scmp.ne.s32.totalorder %s24, %s25
    %p36 = scmp.eq.s32.totalorder %s16, 0
    %p37 = por %p35, %p36
    %p38 = scmp.ne.s32.totalorder %s24, %s25
    %p39 = scmp.eq.s32.totalorder %s17, 1
    %p40 = por %p38, %p39
    %p42 = scmp.ne.s32.totalorder %s25, %s41
    %p43 = scmp.eq.s32.totalorder %s17, 0
    %p44 = por %p42, %p43
    %s46 = sadd.s32 %s45, 1
    %p49 = scmp.eq.s32.totalorder %s11, 1
    %p50 = scmp.ne.s32.totalorder %s45, %s47
    %p51 = scmp.eq.s32.totalorder %s11, 0
    %p52 = por %p50, %p51
    %p53 = scmp.ne.s32.totalorder %s45, %s47
    %p54 = scmp.eq.s32.totalorder %s16, 1
    %p55 = por %p53, %p54
    %p56 = scmp.ne.s32.totalorder %s47, %s48
    %p57 = scmp.eq.s32.totalorder %s16, 0
    %p58 = por %p56, %p57
    %p59 = scmp.ne.s32.totalorder %s47, %s48
    %p60 = scmp.eq.s32.totalorder %s17, 1
    %p61 = por %p59, %p60
    %p63 = scmp.ne.s32.totalorder %s48, %s62
    %p64 = scmp.eq.s32.totalorder %s17, 0
    %p65 = por %p63, %p64
    %s67 = sadd.s32 %s66, 1
    %p70 = scmp.eq.s32.totalorder %s11, 1
    %p71 = scmp.ne.s32.totalorder %s66, %s68
    %p72 = scmp.eq.s32.totalorder %s11, 0
    %p73 = por %p71, %p72
    %p74 = scmp.ne.s32.totalorder %s66, %s68
    %p75 = scmp.eq.s32.totalorder %s16, 1
    %p76 = por %p74, %p75
    %p77 = scmp.ne.s32.totalorder %s68, %s69
    %p78 = scmp.eq.s32.totalorder %s16, 0
    %p79 = por %p77, %p78
    %p80 = scmp.ne.s32.totalorder %s68, %s69
    %p81 = scmp.eq.s32.totalorder %s17, 1
    %p82 = por %p80, %p81
    %p84 = scmp.ne.s32.totalorder %s69, %s83
    %p85 = scmp.eq.s32.totalorder %s17, 0
    %p86 = por %p84, %p85
    %s88 = sadd.s32 %s87, 1
    %p91 = scmp.eq.s32.totalorder %s11, 1
    %p92 = scmp.ne.s32.totalorder %s87, %s89
    %p93 = scmp.eq.s32.totalorder %s11, 0
    %p94 = por %p92, %p93
    %p95 = scmp.ne.s32.totalorder %s87, %s89
    %p96 = scmp.eq.s32.totalorder %s16, 1
    %p97 = por %p95, %p96
    %p98 = scmp.ne.s32.totalorder %s89, %s90
    %p99 = scmp.eq.s32.totalorder %s16, 0
    %p100 = por %p98, %p99
    %p101 = scmp.ne.s32.totalorder %s89, %s90
    %p102 = scmp.eq.s32.totalorder %s17, 1
    %p103 = por %p101, %p102
    %p105 = scmp.ne.s32.totalorder %s90, %s104
    %p106 = scmp.eq.s32.totalorder %s17, 0
    %p107 = por %p105, %p106
    %s109 = sadd.s32 %s108, 1
    %p112 = scmp.eq.s32.totalorder %s11, 1
    %p113 = scmp.ne.s32.totalorder %s108, %s110
    %p114 = scmp.eq.s32.totalorder %s11, 0
    %p115 = por %p113, %p114
    %p116 = scmp.ne.s32.totalorder %s108, %s110
    %p117 = scmp.eq.s32.totalorder %s16, 1
    %p118 = por %p116, %p117
    %p119 = scmp.ne.s32.totalorder %s110, %s111
    %p120 = scmp.eq.s32.totalorder %s16, 0
    %p121 = por %p119, %p120
    %p122 = scmp.ne.s32.totalorder %s110, %s111
    %p123 = scmp.eq.s32.totalorder %s17, 1
    %p124 = por %p122, %p123
    %p126 = scmp.ne.s32.totalorder %s111, %s125
    %p127 = scmp.eq.s32.totalorder %s17, 0
    %p128 = por %p126, %p127
    %s129 = ssub.s32 %s11, %s18
    %p130 = scmp.eq.s32.totalorder %s129, 0
    %s132 = sadd.s32 %s131, 1
    %s133 = scalar_select %p130, %s131, %s132
    %p136 = pneg %p130
    %p137 = scmp.eq.s32.totalorder %s11, 1
    %p138 = por %p136, %p137
    %p139 = scmp.ne.s32.totalorder %s131, %s134
    %p140 = scmp.eq.s32.totalorder %s11, 0
    %p141 = por %p139, %p140
    %p142 = scmp.ne.s32.totalorder %s131, %s134
    %p143 = scmp.eq.s32.totalorder %s16, 1
    %p144 = por %p142, %p143
    %p145 = scmp.ne.s32.totalorder %s134, %s135
    %p146 = scmp.eq.s32.totalorder %s16, 0
    %p147 = por %p145, %p146
    %p148 = scmp.ne.s32.totalorder %s134, %s135
    %p149 = scmp.eq.s32.totalorder %s17, 1
    %p150 = por %p148, %p149
    %p152 = scmp.ne.s32.totalorder %s135, %s151
    %p153 = scmp.eq.s32.totalorder %s17, 0
    %p154 = por %p152, %p153
    %p155 = scmp.le.s32.totalorder 1, %s11
    %p156 = scmp.lt.s32.totalorder %s11, 3
    %p157 = pnand %p155, %p156
    %p158 = pneg %p157
    // Predicated region
    $region9: #{contracter_forward.1} parent=5 // pred_check
      _
    $region10: #{contracter_forward.1} parent=5 // pred_check_branch
      %160 = sbr.rel (%p157) target = $region12
    $region11: #{contracter_forward.1} parent=5 // pred_region
      %s161 = ssub.s32 %s11, 1
      // Predicated region
      $region13: #{contracter_forward.1} parent=11 // pred_check
        %p162 = pneg %p58
      $region14: #{contracter_forward.1} parent=11 // pred_check_branch
        %164 = sbr.rel (%p162) target = $region16
      $region15: #{contracter_forward.1} parent=11 // pred_region
        _
      $region16: #{contracter_forward.1} parent=11 // pred_fallthru
        _
      // Predicated region
      $region17: #{contracter_forward.1} parent=11 // pred_check
        %p165 = pneg %p79
      $region18: #{contracter_forward.1} parent=11 // pred_check_branch
        %167 = sbr.rel (%p165) target = $region20
      $region19: #{contracter_forward.1} parent=11 // pred_region
        _
      $region20: #{contracter_forward.1} parent=11 // pred_fallthru
        _
      // Predicated region
      $region21: #{contracter_forward.1} parent=11 // pred_check
        %p168 = pneg %p100
      $region22: #{contracter_forward.1} parent=11 // pred_check_branch
        %170 = sbr.rel (%p168) target = $region24
      $region23: #{contracter_forward.1} parent=11 // pred_region
        _
      $region24: #{contracter_forward.1} parent=11 // pred_fallthru
        _
      // Predicated region
      $region25: #{contracter_forward.1} parent=11 // pred_check
        %p171 = pneg %p121
      $region26: #{contracter_forward.1} parent=11 // pred_check_branch
        %173 = sbr.rel (%p171) target = $region28
      $region27: #{contracter_forward.1} parent=11 // pred_region
        _
      $region28: #{contracter_forward.1} parent=11 // pred_fallthru
        _
    $region12: #{contracter_forward.1} parent=5 // pred_fallthru
      _
    %p174 = scmp.lt.s32.totalorder %s11, 2
    // Predicated region
    $region29: #{contracter_forward.1} parent=5 // pred_check
      %p175 = pneg %p174
    $region30: #{contracter_forward.1} parent=5 // pred_check_branch
      %177 = sbr.rel (%p175) target = $region32
    $region31: #{contracter_forward.1} parent=5 // pred_region
      // Predicated region
      $region33: #{contracter_forward.1} parent=31 // pred_check
        %p178 = pneg %p31
      $region34: #{contracter_forward.1} parent=31 // pred_check_branch
        %180 = sbr.rel (%p178) target = $region36
      $region35: #{contracter_forward.1} parent=31 // pred_region
        %p181 = scmp.lt.s32.totalorder %s11, 1
        %s182 = scalar_select %p181, %s11, 1
        %s183 = smul.addr %s182, 16
        %s184 = smul.addr %s183, 8
        %s185 = scalar_lea.vmem %s0, %s184
      $region36: #{contracter_forward.1} parent=31 // pred_fallthru
        _
    $region32: #{contracter_forward.1} parent=5 // pred_fallthru
      _
    %p186 = scmp.le.s32.totalorder 1, %s11
    %p187 = scmp.lt.s32.totalorder %s11, 3
    %p188 = pnand %p186, %p187
    %p189 = pneg %p188
    // Predicated region
    $region37: #{contracter_forward.1} parent=5 // pred_check
      _
    $region38: #{contracter_forward.1} parent=5 // pred_check_branch
      %191 = sbr.rel (%p188) target = $region40
    $region39: #{contracter_forward.1} parent=5 // pred_region
      %s192 = ssub.s32 %s11, 1
      %p193 = scmp.lt.s32.totalorder %s16, 1
      %s194 = scalar_select %p193, %s16, 1
      %s195 = smul.addr %s194, 16
      %s196 = smul.addr %s195, 8
      %s197 = scalar_lea.vmem %s0, %s196
      %p198 = pneg %p37
      %p199 = pneg %p34
      %p200 = pneg %p58
      %p201 = pneg %p55
      %p202 = pneg %p79
      %p203 = pneg %p76
      %p204 = pneg %p100
      %p205 = pneg %p97
      %p206 = pneg %p121
      %p207 = pneg %p118
      %p208 = pneg %p147
      %p209 = pneg %p144
      %p210 = scmp.lt.s32.totalorder %s16, 1
      %s211 = scalar_select %p210, %s16, 1
      %s212 = smul.addr %s211, 8
      %s213 = smul.addr %s212, 8
      %s214 = scalar_lea.vmem %s5, %s213
      %p215 = scmp.lt.s32.totalorder %s16, 1
      %s216 = scalar_select %p215, %s16, 1
      %s217 = smul.addr %s216, 16
      %s218 = smul.addr %s217, 8
      %s219 = scalar_lea.vmem %s0, %s218
      %p220 = scmp.lt.s32.totalorder %s16, 1
      %s221 = scalar_select %p220, %s16, 1
      %s222 = smul.addr %s221, 8
      %s223 = smul.addr %s222, 8
      %s224 = scalar_lea.vmem %s5, %s223
      %v226 = vld [vmem:[%s219] sm:$0xff]
      %v227 = vld [vmem:[%s219 + $0x8] sm:$0xff]
      %v228 = vld [vmem:[%s219 + $0x10] sm:$0xff]
      %v229 = vld [vmem:[%s219 + $0x18] sm:$0xff]
      %v230 = vld [vmem:[%s219 + $0x20] sm:$0xff]
      %v231 = vld [vmem:[%s219 + $0x28] sm:$0xff]
      %v232 = vld [vmem:[%s219 + $0x30] sm:$0xff]
      %v233 = vld [vmem:[%s219 + $0x38] sm:$0xff]
      %v234 = vld [vmem:[%s219 + $0x40] sm:$0xff]
      %v235 = vld [vmem:[%s219 + $0x48] sm:$0xff]
      %v236 = vld [vmem:[%s219 + $0x50] sm:$0xff]
      %v237 = vld [vmem:[%s219 + $0x58] sm:$0xff]
      %v238 = vld [vmem:[%s219 + $0x60] sm:$0xff]
      %v239 = vld [vmem:[%s219 + $0x68] sm:$0xff]
      %v240 = vld [vmem:[%s219 + $0x70] sm:$0xff]
      %v241 = vld [vmem:[%s219 + $0x78] sm:$0xff]
      %v242 = vmax.f32 %v226, %v227
      %v243 = vmax.f32 %v228, %v229
      %v244 = vmax.f32 %v230, %v231
      %v245 = vmax.f32 %v232, %v233
      %v246 = vmax.f32 %v234, %v235
      %v247 = vmax.f32 %v236, %v237
      %v248 = vmax.f32 %v238, %v239
      %v249 = vmax.f32 %v240, %v241
      %258 = vrot.lane.b32.xlu0 %v242, 124
      %v259 = vpop.permute.xlu0 %258
      %260 = vrot.lane.b32.xlu0 %v243, 124
      %v261 = vpop.permute.xlu0 %260
      %262 = vrot.lane.b32.xlu0 %v244, 124
      %v263 = vpop.permute.xlu0 %262
      %264 = vrot.lane.b32.xlu0 %v245, 124
      %v265 = vpop.permute.xlu0 %264
      %266 = vrot.lane.b32.xlu0 %v246, 124
      %v267 = vpop.permute.xlu0 %266
      %268 = vrot.lane.b32.xlu0 %v247, 124
      %v269 = vpop.permute.xlu0 %268
      %270 = vrot.lane.b32.xlu0 %v248, 124
      %v271 = vpop.permute.xlu0 %270
      %272 = vrot.lane.b32.xlu0 %v249, 124
      %v273 = vpop.permute.xlu0 %272
      %v282 = vmax.f32 %v242, %v259
      %v283 = vmax.f32 %v243, %v261
      %v284 = vmax.f32 %v244, %v263
      %v285 = vmax.f32 %v245, %v265
      %v286 = vmax.f32 %v246, %v267
      %v287 = vmax.f32 %v247, %v269
      %v288 = vmax.f32 %v248, %v271
      %v289 = vmax.f32 %v249, %v273
      %vm290 = vcmask 31744
      %291 = vst.msk [vmem:[#allocation2] sm:$0xff] %vm290, 0.0
      %vm292 = vcmask 25600
      %293 = vst.msk [vmem:[#allocation2 + $0x8] sm:$0x3] %vm292, 0.0
      %s294 = scalar_lea.vmem [#allocation2], 144
      %295 = vst.msk [vmem:[%s294] sm:$0xff] %vm290, 0.0
      %296 = vst.msk [vmem:[%s294 + $0x8] sm:$0x3] %vm292, 0.0
      %vm297 = vcmask 24576
      %298 = vst.msk [vmem:[#allocation2] sm:$0x1] %vm297, 0.0
      %299 = vst.msk [vmem:[#allocation2 + $0x10] sm:$0x1] %vm297, 0.0
      %300 = vst.msk [vmem:[#allocation2 + $0x20] sm:$0x1] %vm297, 0.0
      %301 = vst.msk [vmem:[#allocation2 + $0x30] sm:$0x1] %vm297, 0.0
      %302 = vst.msk [vmem:[#allocation2 + $0x40] sm:$0x1] %vm297, 0.0
      %303 = vst.msk [vmem:[#allocation2 + $0x50] sm:$0x1] %vm297, 0.0
      %304 = vst.msk [vmem:[#allocation2 + $0x60] sm:$0x1] %vm297, 0.0
      %305 = vst.msk [vmem:[#allocation2 + $0x70] sm:$0x1] %vm297, 0.0
      %306 = vst.msk [vmem:[#allocation2 + $0x80] sm:$0x1] %vm297, 0.0
      %307 = vst.msk [vmem:[#allocation2 + $0x90] sm:$0x1] %vm297, 0.0
      %308 = vst.msk [vmem:[#allocation2 + $0x9] sm:$0x1] %vm297, 0.0
      %309 = vst.msk [vmem:[#allocation2 + $0x19] sm:$0x1] %vm297, 0.0
      %310 = vst.msk [vmem:[#allocation2 + $0x29] sm:$0x1] %vm297, 0.0
      %311 = vst.msk [vmem:[#allocation2 + $0x39] sm:$0x1] %vm297, 0.0
      %312 = vst.msk [vmem:[#allocation2 + $0x49] sm:$0x1] %vm297, 0.0
      %313 = vst.msk [vmem:[#allocation2 + $0x59] sm:$0x1] %vm297, 0.0
      %314 = vst.msk [vmem:[#allocation2 + $0x69] sm:$0x1] %vm297, 0.0
      %315 = vst.msk [vmem:[#allocation2 + $0x79] sm:$0x1] %vm297, 0.0
      %316 = vst.msk [vmem:[#allocation2 + $0x89] sm:$0x1] %vm297, 0.0
      %317 = vst.msk [vmem:[#allocation2 + $0x99] sm:$0x1] %vm297, 0.0
      %s318 = scalar_lea.vmem [#allocation2], 16
      %319 = vst.msk [vmem:[%s318 + $0x1] sm:$0xff] %vm290, %v282
      %320 = vst.msk [vmem:[%s318 + $0x11] sm:$0xff] %vm290, %v283
      %321 = vst.msk [vmem:[%s318 + $0x21] sm:$0xff] %vm290, %v284
      %322 = vst.msk [vmem:[%s318 + $0x31] sm:$0xff] %vm290, %v285
      %323 = vst.msk [vmem:[%s318 + $0x41] sm:$0xff] %vm290, %v286
      %324 = vst.msk [vmem:[%s318 + $0x51] sm:$0xff] %vm290, %v287
      %325 = vst.msk [vmem:[%s318 + $0x61] sm:$0xff] %vm290, %v288
      %326 = vst.msk [vmem:[%s318 + $0x71] sm:$0xff] %vm290, %v289
      %v327 = vld [vmem:[#allocation2] sm:$0xff]
      %v328 = vld [vmem:[#allocation2 + $0x10] sm:$0xff]
      %v329 = vld [vmem:[#allocation2 + $0x20] sm:$0xff]
      %v330 = vld [vmem:[#allocation2 + $0x30] sm:$0xff]
      %v331 = vld [vmem:[#allocation2 + $0x40] sm:$0xff]
      %v332 = vld [vmem:[#allocation2 + $0x50] sm:$0xff]
      %v333 = vld [vmem:[#allocation2 + $0x60] sm:$0xff]
      %v334 = vld [vmem:[#allocation2 + $0x70] sm:$0xff]
      %v335 = vpack.c.bf16 %v327, %v327
      %v336 = vpack.c.bf16 %v328, %v328
      %v337 = vpack.c.bf16 %v329, %v329
      %v338 = vpack.c.bf16 %v330, %v330
      %v339 = vpack.c.bf16 %v331, %v331
      %v340 = vpack.c.bf16 %v332, %v332
      %v341 = vpack.c.bf16 %v333, %v333
      %v342 = vpack.c.bf16 %v334, %v334
      %vm343 = vcmask 27648
      %344 = vst.msk [vmem:[#allocation3] sm:$0xf] %vm343, %v335
      %345 = vst.msk [vmem:[#allocation3 + $0x4] sm:$0xf] %vm343, %v336
      %346 = vst.msk [vmem:[#allocation3 + $0x8] sm:$0xf] %vm343, %v337
      %347 = vst.msk [vmem:[#allocation3 + $0xc] sm:$0xf] %vm343, %v338
      %348 = vst.msk [vmem:[#allocation3 + $0x10] sm:$0xf] %vm343, %v339
      %349 = vst.msk [vmem:[#allocation3 + $0x14] sm:$0xf] %vm343, %v340
      %350 = vst.msk [vmem:[#allocation3 + $0x18] sm:$0xf] %vm343, %v341
      %351 = vst.msk [vmem:[#allocation3 + $0x1c] sm:$0xf] %vm343, %v342
      %v352 = vld [vmem:[#allocation2 + $0x1] sm:$0xff]
      %v353 = vld [vmem:[#allocation2 + $0x11] sm:$0xff]
      %v354 = vld [vmem:[#allocation2 + $0x21] sm:$0xff]
      %v355 = vld [vmem:[#allocation2 + $0x31] sm:$0xff]
      %v356 = vld [vmem:[#allocation2 + $0x41] sm:$0xff]
      %v357 = vld [vmem:[#allocation2 + $0x51] sm:$0xff]
      %v358 = vld [vmem:[#allocation2 + $0x61] sm:$0xff]
      %v359 = vld [vmem:[#allocation2 + $0x71] sm:$0xff]
      %v360 = vpack.c.bf16 %v352, %v352
      %v361 = vpack.c.bf16 %v353, %v353
      %v362 = vpack.c.bf16 %v354, %v354
      %v363 = vpack.c.bf16 %v355, %v355
      %v364 = vpack.c.bf16 %v356, %v356
      %v365 = vpack.c.bf16 %v357, %v357
      %v366 = vpack.c.bf16 %v358, %v358
      %v367 = vpack.c.bf16 %v359, %v359
      %v376 = vunpack.c.l.b16 %v360
      %v377 = vunpack.c.l.b16 %v361
      %v378 = vunpack.c.l.b16 %v362
      %v379 = vunpack.c.l.b16 %v363
      %v380 = vunpack.c.l.b16 %v364
      %v381 = vunpack.c.l.b16 %v365
      %v382 = vunpack.c.l.b16 %v366
      %v383 = vunpack.c.l.b16 %v367
      %v384 = vpack.c.b16 %v376, %v376
      %v385 = vpack.c.b16 %v377, %v377
      %v386 = vpack.c.b16 %v378, %v378
      %v387 = vpack.c.b16 %v379, %v379
      %v388 = vpack.c.b16 %v380, %v380
      %v389 = vpack.c.b16 %v381, %v381
      %v390 = vpack.c.b16 %v382, %v382
      %v391 = vpack.c.b16 %v383, %v383
      %392 = vrot.lane.b32.xlu0 %v384, 4
      %v393 = vpop.permute.xlu0 %392
      %394 = vrot.lane.b32.xlu0 %v385, 4
      %v395 = vpop.permute.xlu0 %394
      %396 = vrot.lane.b32.xlu0 %v386, 4
      %v397 = vpop.permute.xlu0 %396
      %398 = vrot.lane.b32.xlu0 %v387, 4
      %v399 = vpop.permute.xlu0 %398
      %400 = vrot.lane.b32.xlu0 %v388, 4
      %v401 = vpop.permute.xlu0 %400
      %402 = vrot.lane.b32.xlu0 %v389, 4
      %v403 = vpop.permute.xlu0 %402
      %404 = vrot.lane.b32.xlu0 %v390, 4
      %v405 = vpop.permute.xlu0 %404
      %406 = vrot.lane.b32.xlu0 %v391, 4
      %v407 = vpop.permute.xlu0 %406
      %vm416 = vcmask 60448
      %417 = vst.msk [vmem:[#allocation3] sm:$0xf] %vm416, %v393
      %418 = vst.msk [vmem:[#allocation3 + $0x4] sm:$0xf] %vm416, %v395
      %419 = vst.msk [vmem:[#allocation3 + $0x8] sm:$0xf] %vm416, %v397
      %420 = vst.msk [vmem:[#allocation3 + $0xc] sm:$0xf] %vm416, %v399
      %421 = vst.msk [vmem:[#allocation3 + $0x10] sm:$0xf] %vm416, %v401
      %422 = vst.msk [vmem:[#allocation3 + $0x14] sm:$0xf] %vm416, %v403
      %423 = vst.msk [vmem:[#allocation3 + $0x18] sm:$0xf] %vm416, %v405
      %424 = vst.msk [vmem:[#allocation3 + $0x1c] sm:$0xf] %vm416, %v407
      %v425 = vld [vmem:[#allocation2 + $0x2] sm:$0xff]
      %v426 = vld [vmem:[#allocation2 + $0x12] sm:$0xff]
      %v427 = vld [vmem:[#allocation2 + $0x22] sm:$0xff]
      %v428 = vld [vmem:[#allocation2 + $0x32] sm:$0xff]
      %v429 = vld [vmem:[#allocation2 + $0x42] sm:$0xff]
      %v430 = vld [vmem:[#allocation2 + $0x52] sm:$0xff]
      %v431 = vld [vmem:[#allocation2 + $0x62] sm:$0xff]
      %v432 = vld [vmem:[#allocation2 + $0x72] sm:$0xff]
      %v433 = vpack.c.bf16 %v425, %v425
      %v434 = vpack.c.bf16 %v426, %v426
      %v435 = vpack.c.bf16 %v427, %v427
      %v436 = vpack.c.bf16 %v428, %v428
      %v437 = vpack.c.bf16 %v429, %v429
      %v438 = vpack.c.bf16 %v430, %v430
      %v439 = vpack.c.bf16 %v431, %v431
      %v440 = vpack.c.bf16 %v432, %v432
      %v449 = vunpack.c.l.b16 %v433
      %v450 = vunpack.c.l.b16 %v434
      %v451 = vunpack.c.l.b16 %v435
      %v452 = vunpack.c.l.b16 %v436
      %v453 = vunpack.c.l.b16 %v437
      %v454 = vunpack.c.l.b16 %v438
      %v455 = vunpack.c.l.b16 %v439
      %v456 = vunpack.c.l.b16 %v440
      %v457 = vpack.c.b16 %v449, %v449
      %v458 = vpack.c.b16 %v450, %v450
      %v459 = vpack.c.b16 %v451, %v451
      %v460 = vpack.c.b16 %v452, %v452
      %v461 = vpack.c.b16 %v453, %v453
      %v462 = vpack.c.b16 %v454, %v454
      %v463 = vpack.c.b16 %v455, %v455
      %v464 = vpack.c.b16 %v456, %v456
      %465 = vrot.lane.b32.xlu0 %v457, 8
      %v466 = vpop.permute.xlu0 %465
      %467 = vrot.lane.b32.xlu0 %v458, 8
      %v468 = vpop.permute.xlu0 %467
      %469 = vrot.lane.b32.xlu0 %v459, 8
      %v470 = vpop.permute.xlu0 %469
      %471 = vrot.lane.b32.xlu0 %v460, 8
      %v472 = vpop.permute.xlu0 %471
      %473 = vrot.lane.b32.xlu0 %v461, 8
      %v474 = vpop.permute.xlu0 %473
      %475 = vrot.lane.b32.xlu0 %v462, 8
      %v476 = vpop.permute.xlu0 %475
      %477 = vrot.lane.b32.xlu0 %v463, 8
      %v478 = vpop.permute.xlu0 %477
      %479 = vrot.lane.b32.xlu0 %v464, 8
      %v480 = vpop.permute.xlu0 %479
      %vm489 = vcmask 93248
      %490 = vst.msk [vmem:[#allocation3] sm:$0xf] %vm489, %v466
      %491 = vst.msk [vmem:[#allocation3 + $0x4] sm:$0xf] %vm489, %v468
      %492 = vst.msk [vmem:[#allocation3 + $0x8] sm:$0xf] %vm489, %v470
      %493 = vst.msk [vmem:[#allocation3 + $0xc] sm:$0xf] %vm489, %v472
      %494 = vst.msk [vmem:[#allocation3 + $0x10] sm:$0xf] %vm489, %v474
      %495 = vst.msk [vmem:[#allocation3 + $0x14] sm:$0xf] %vm489, %v476
      %496 = vst.msk [vmem:[#allocation3 + $0x18] sm:$0xf] %vm489, %v478
      %497 = vst.msk [vmem:[#allocation3 + $0x1c] sm:$0xf] %vm489, %v480
      %v498 = vld [vmem:[%s318] sm:$0xff]
      %v499 = vld [vmem:[%s318 + $0x10] sm:$0xff]
      %v500 = vld [vmem:[%s318 + $0x20] sm:$0xff]
      %v501 = vld [vmem:[%s318 + $0x30] sm:$0xff]
      %v502 = vld [vmem:[%s318 + $0x40] sm:$0xff]
      %v503 = vld [vmem:[%s318 + $0x50] sm:$0xff]
      %v504 = vld [vmem:[%s318 + $0x60] sm:$0xff]
      %v505 = vld [vmem:[%s318 + $0x70] sm:$0xff]
      %v506 = vpack.c.bf16 %v498, %v498
      %v507 = vpack.c.bf16 %v499, %v499
      %v508 = vpack.c.bf16 %v500, %v500
      %v509 = vpack.c.bf16 %v501, %v501
      %v510 = vpack.c.bf16 %v502, %v502
      %v511 = vpack.c.bf16 %v503, %v503
      %v512 = vpack.c.bf16 %v504, %v504
      %v513 = vpack.c.bf16 %v505, %v505
      %v522 = vunpack.c.l.b16 %v506
      %v523 = vunpack.c.l.b16 %v507
      %v524 = vunpack.c.l.b16 %v508
      %v525 = vunpack.c.l.b16 %v509
      %v526 = vunpack.c.l.b16 %v510
      %v527 = vunpack.c.l.b16 %v511
      %v528 = vunpack.c.l.b16 %v512
      %v529 = vunpack.c.l.b16 %v513
      %v530 = vpack.c.b16 %v522, %v522
      %v531 = vpack.c.b16 %v523, %v523
      %v532 = vpack.c.b16 %v524, %v524
      %v533 = vpack.c.b16 %v525, %v525
      %v534 = vpack.c.b16 %v526, %v526
      %v535 = vpack.c.b16 %v527, %v527
      %v536 = vpack.c.b16 %v528, %v528
      %v537 = vpack.c.b16 %v529, %v529
      %538 = vrot.lane.b32.xlu0 %v530, 12
      %v539 = vpop.permute.xlu0 %538
      %540 = vrot.lane.b32.xlu0 %v531, 12
      %v541 = vpop.permute.xlu0 %540
      %542 = vrot.lane.b32.xlu0 %v532, 12
      %v543 = vpop.permute.xlu0 %542
      %544 = vrot.lane.b32.xlu0 %v533, 12
      %v545 = vpop.permute.xlu0 %544
      %546 = vrot.lane.b32.xlu0 %v534, 12
      %v547 = vpop.permute.xlu0 %546
      %548 = vrot.lane.b32.xlu0 %v535, 12
      %v549 = vpop.permute.xlu0 %548
      %550 = vrot.lane.b32.xlu0 %v536, 12
      %v551 = vpop.permute.xlu0 %550
      %552 = vrot.lane.b32.xlu0 %v537, 12
      %v553 = vpop.permute.xlu0 %552
      %vm562 = vcmask 126048
      %563 = vst.msk [vmem:[#allocation3] sm:$0xf] %vm562, %v539
      %564 = vst.msk [vmem:[#allocation3 + $0x4] sm:$0xf] %vm562, %v541
      %565 = vst.msk [vmem:[#allocation3 + $0x8] sm:$0xf] %vm562, %v543
      %566 = vst.msk [vmem:[#allocation3 + $0xc] sm:$0xf] %vm562, %v545
      %567 = vst.msk [vmem:[#allocation3 + $0x10] sm:$0xf] %vm562, %v547
      %568 = vst.msk [vmem:[#allocation3 + $0x14] sm:$0xf] %vm562, %v549
      %569 = vst.msk [vmem:[#allocation3 + $0x18] sm:$0xf] %vm562, %v551
      %570 = vst.msk [vmem:[#allocation3 + $0x1c] sm:$0xf] %vm562, %v553
      %v571 = vld [vmem:[%s318 + $0x1] sm:$0xff]
      %v572 = vld [vmem:[%s318 + $0x11] sm:$0xff]
      %v573 = vld [vmem:[%s318 + $0x21] sm:$0xff]
      %v574 = vld [vmem:[%s318 + $0x31] sm:$0xff]
      %v575 = vld [vmem:[%s318 + $0x41] sm:$0xff]
      %v576 = vld [vmem:[%s318 + $0x51] sm:$0xff]
      %v577 = vld [vmem:[%s318 + $0x61] sm:$0xff]
      %v578 = vld [vmem:[%s318 + $0x71] sm:$0xff]
      %v579 = vpack.c.bf16 %v571, %v571
      %v580 = vpack.c.bf16 %v572, %v572
      %v581 = vpack.c.bf16 %v573, %v573
      %v582 = vpack.c.bf16 %v574, %v574
      %v583 = vpack.c.bf16 %v575, %v575
      %v584 = vpack.c.bf16 %v576, %v576
      %v585 = vpack.c.bf16 %v577, %v577
      %v586 = vpack.c.bf16 %v578, %v578
      %v595 = vunpack.c.l.b16 %v579
      %v596 = vunpack.c.l.b16 %v580
      %v597 = vunpack.c.l.b16 %v581
      %v598 = vunpack.c.l.b16 %v582
      %v599 = vunpack.c.l.b16 %v583
      %v600 = vunpack.c.l.b16 %v584
      %v601 = vunpack.c.l.b16 %v585
      %v602 = vunpack.c.l.b16 %v586
      %v603 = vpack.c.b16 %v595, %v595
      %v604 = vpack.c.b16 %v596, %v596
      %v605 = vpack.c.b16 %v597, %v597
      %v606 = vpack.c.b16 %v598, %v598
      %v607 = vpack.c.b16 %v599, %v599
      %v608 = vpack.c.b16 %v600, %v600
      %v609 = vpack.c.b16 %v601, %v601
      %v610 = vpack.c.b16 %v602, %v602
      %611 = vrot.lane.b32.xlu0 %v603, 16
      %v612 = vpop.permute.xlu0 %611
      %613 = vrot.lane.b32.xlu0 %v604, 16
      %v614 = vpop.permute.xlu0 %613
      %615 = vrot.lane.b32.xlu0 %v605, 16
      %v616 = vpop.permute.xlu0 %615
      %617 = vrot.lane.b32.xlu0 %v606, 16
      %v618 = vpop.permute.xlu0 %617
      %619 = vrot.lane.b32.xlu0 %v607, 16
      %v620 = vpop.permute.xlu0 %619
      %621 = vrot.lane.b32.xlu0 %v608, 16
      %v622 = vpop.permute.xlu0 %621
      %623 = vrot.lane.b32.xlu0 %v609, 16
      %v624 = vpop.permute.xlu0 %623
      %625 = vrot.lane.b32.xlu0 %v610, 16
      %v626 = vpop.permute.xlu0 %625
      %vm635 = vcmask 158848
      %636 = vst.msk [vmem:[#allocation3] sm:$0xf] %vm635, %v612
      %637 = vst.msk [vmem:[#allocation3 + $0x4] sm:$0xf] %vm635, %v614
      %638 = vst.msk [vmem:[#allocation3 + $0x8] sm:$0xf] %vm635, %v616
      %639 = vst.msk [vmem:[#allocation3 + $0xc] sm:$0xf] %vm635, %v618
      %640 = vst.msk [vmem:[#allocation3 + $0x10] sm:$0xf] %vm635, %v620
      %641 = vst.msk [vmem:[#allocation3 + $0x14] sm:$0xf] %vm635, %v622
      %642 = vst.msk [vmem:[#allocation3 + $0x18] sm:$0xf] %vm635, %v624
      %643 = vst.msk [vmem:[#allocation3 + $0x1c] sm:$0xf] %vm635, %v626
      %v644 = vld [vmem:[%s318 + $0x2] sm:$0xff]
      %v645 = vld [vmem:[%s318 + $0x12] sm:$0xff]
      %v646 = vld [vmem:[%s318 + $0x22] sm:$0xff]
      %v647 = vld [vmem:[%s318 + $0x32] sm:$0xff]
      %v648 = vld [vmem:[%s318 + $0x42] sm:$0xff]
      %v649 = vld [vmem:[%s318 + $0x52] sm:$0xff]
      %v650 = vld [vmem:[%s318 + $0x62] sm:$0xff]
      %v651 = vld [vmem:[%s318 + $0x72] sm:$0xff]
      %v652 = vpack.c.bf16 %v644, %v644
      %v653 = vpack.c.bf16 %v645, %v645
      %v654 = vpack.c.bf16 %v646, %v646
      %v655 = vpack.c.bf16 %v647, %v647
      %v656 = vpack.c.bf16 %v648, %v648
      %v657 = vpack.c.bf16 %v649, %v649
      %v658 = vpack.c.bf16 %v650, %v650
      %v659 = vpack.c.bf16 %v651, %v651
      %v668 = vunpack.c.l.b16 %v652
      %v669 = vunpack.c.l.b16 %v653
      %v670 = vunpack.c.l.b16 %v654
      %v671 = vunpack.c.l.b16 %v655
      %v672 = vunpack.c.l.b16 %v656
      %v673 = vunpack.c.l.b16 %v657
      %v674 = vunpack.c.l.b16 %v658
      %v675 = vunpack.c.l.b16 %v659
      %v676 = vpack.c.b16 %v668, %v668
      %v677 = vpack.c.b16 %v669, %v669
      %v678 = vpack.c.b16 %v670, %v670
      %v679 = vpack.c.b16 %v671, %v671
      %v680 = vpack.c.b16 %v672, %v672
      %v681 = vpack.c.b16 %v673, %v673
      %v682 = vpack.c.b16 %v674, %v674
      %v683 = vpack.c.b16 %v675, %v675
      %684 = vrot.lane.b32.xlu0 %v676, 20
      %v685 = vpop.permute.xlu0 %684
      %686 = vrot.lane.b32.xlu0 %v677, 20
      %v687 = vpop.permute.xlu0 %686
      %688 = vrot.lane.b32.xlu0 %v678, 20
      %v689 = vpop.permute.xlu0 %688
      %690 = vrot.lane.b32.xlu0 %v679, 20
      %v691 = vpop.permute.xlu0 %690
      %692 = vrot.lane.b32.xlu0 %v680, 20
      %v693 = vpop.permute.xlu0 %692
      %694 = vrot.lane.b32.xlu0 %v681, 20
      %v695 = vpop.permute.xlu0 %694
      %696 = vrot.lane.b32.xlu0 %v682, 20
      %v697 = vpop.permute.xlu0 %696
      %698 = vrot.lane.b32.xlu0 %v683, 20
      %v699 = vpop.permute.xlu0 %698
      %vm708 = vcmask 191648
      %709 = vst.msk [vmem:[#allocation3] sm:$0xf] %vm708, %v685
      %710 = vst.msk [vmem:[#allocation3 + $0x4] sm:$0xf] %vm708, %v687
      %711 = vst.msk [vmem:[#allocation3 + $0x8] sm:$0xf] %vm708, %v689
      %712 = vst.msk [vmem:[#allocation3 + $0xc] sm:$0xf] %vm708, %v691
      %713 = vst.msk [vmem:[#allocation3 + $0x10] sm:$0xf] %vm708, %v693
      %714 = vst.msk [vmem:[#allocation3 + $0x14] sm:$0xf] %vm708, %v695
      %715 = vst.msk [vmem:[#allocation3 + $0x18] sm:$0xf] %vm708, %v697
      %716 = vst.msk [vmem:[#allocation3 + $0x1c] sm:$0xf] %vm708, %v699
      %s717 = scalar_lea.vmem [#allocation2], 32
      %v718 = vld [vmem:[%s717] sm:$0xff]
      %v719 = vld [vmem:[%s717 + $0x10] sm:$0xff]
      %v720 = vld [vmem:[%s717 + $0x20] sm:$0xff]
      %v721 = vld [vmem:[%s717 + $0x30] sm:$0xff]
      %v722 = vld [vmem:[%s717 + $0x40] sm:$0xff]
      %v723 = vld [vmem:[%s717 + $0x50] sm:$0xff]
      %v724 = vld [vmem:[%s717 + $0x60] sm:$0xff]
      %v725 = vld [vmem:[%s717 + $0x70] sm:$0xff]
      %v726 = vpack.c.bf16 %v718, %v718
      %v727 = vpack.c.bf16 %v719, %v719
      %v728 = vpack.c.bf16 %v720, %v720
      %v729 = vpack.c.bf16 %v721, %v721
      %v730 = vpack.c.bf16 %v722, %v722
      %v731 = vpack.c.bf16 %v723, %v723
      %v732 = vpack.c.bf16 %v724, %v724
      %v733 = vpack.c.bf16 %v725, %v725
      %v742 = vunpack.c.l.b16 %v726
      %v743 = vunpack.c.l.b16 %v727
      %v744 = vunpack.c.l.b16 %v728
      %v745 = vunpack.c.l.b16 %v729
      %v746 = vunpack.c.l.b16 %v730
      %v747 = vunpack.c.l.b16 %v731
      %v748 = vunpack.c.l.b16 %v732
      %v749 = vunpack.c.l.b16 %v733
      %v750 = vpack.c.b16 %v742, %v742
      %v751 = vpack.c.b16 %v743, %v743
      %v752 = vpack.c.b16 %v744, %v744
      %v753 = vpack.c.b16 %v745, %v745
      %v754 = vpack.c.b16 %v746, %v746
      %v755 = vpack.c.b16 %v747, %v747
      %v756 = vpack.c.b16 %v748, %v748
      %v757 = vpack.c.b16 %v749, %v749
      %758 = vrot.lane.b32.xlu0 %v750, 24
      %v759 = vpop.permute.xlu0 %758
      %760 = vrot.lane.b32.xlu0 %v751, 24
      %v761 = vpop.permute.xlu0 %760
      %762 = vrot.lane.b32.xlu0 %v752, 24
      %v763 = vpop.permute.xlu0 %762
      %764 = vrot.lane.b32.xlu0 %v753, 24
      %v765 = vpop.permute.xlu0 %764
      %766 = vrot.lane.b32.xlu0 %v754, 24
      %v767 = vpop.permute.xlu0 %766
      %768 = vrot.lane.b32.xlu0 %v755, 24
      %v769 = vpop.permute.xlu0 %768
      %770 = vrot.lane.b32.xlu0 %v756, 24
      %v771 = vpop.permute.xlu0 %770
      %772 = vrot.lane.b32.xlu0 %v757, 24
      %v773 = vpop.permute.xlu0 %772
      %vm782 = vcmask 224448
      %783 = vst.msk [vmem:[#allocation3] sm:$0xf] %vm782, %v759
      %784 = vst.msk [vmem:[#allocation3 + $0x4] sm:$0xf] %vm782, %v761
      %785 = vst.msk [vmem:[#allocation3 + $0x8] sm:$0xf] %vm782, %v763
      %786 = vst.msk [vmem:[#allocation3 + $0xc] sm:$0xf] %vm782, %v765
      %787 = vst.msk [vmem:[#allocation3 + $0x10] sm:$0xf] %vm782, %v767
      %788 = vst.msk [vmem:[#allocation3 + $0x14] sm:$0xf] %vm782, %v769
      %789 = vst.msk [vmem:[#allocation3 + $0x18] sm:$0xf] %vm782, %v771
      %790 = vst.msk [vmem:[#allocation3 + $0x1c] sm:$0xf] %vm782, %v773
      %v791 = vld [vmem:[%s717 + $0x1] sm:$0xff]
      %v792 = vld [vmem:[%s717 + $0x11] sm:$0xff]
      %v793 = vld [vmem:[%s717 + $0x21] sm:$0xff]
      %v794 = vld [vmem:[%s717 + $0x31] sm:$0xff]
      %v795 = vld [vmem:[%s717 + $0x41] sm:$0xff]
      %v796 = vld [vmem:[%s717 + $0x51] sm:$0xff]
      %v797 = vld [vmem:[%s717 + $0x61] sm:$0xff]
      %v798 = vld [vmem:[%s717 + $0x71] sm:$0xff]
      %v799 = vpack.c.bf16 %v791, %v791
      %v800 = vpack.c.bf16 %v792, %v792
      %v801 = vpack.c.bf16 %v793, %v793
      %v802 = vpack.c.bf16 %v794, %v794
      %v803 = vpack.c.bf16 %v795, %v795
      %v804 = vpack.c.bf16 %v796, %v796
      %v805 = vpack.c.bf16 %v797, %v797
      %v806 = vpack.c.bf16 %v798, %v798
      %v815 = vunpack.c.l.b16 %v799
      %v816 = vunpack.c.l.b16 %v800
      %v817 = vunpack.c.l.b16 %v801
      %v818 = vunpack.c.l.b16 %v802
      %v819 = vunpack.c.l.b16 %v803
      %v820 = vunpack.c.l.b16 %v804
      %v821 = vunpack.c.l.b16 %v805
      %v822 = vunpack.c.l.b16 %v806
      %v823 = vpack.c.b16 %v815, %v815
      %v824 = vpack.c.b16 %v816, %v816
      %v825 = vpack.c.b16 %v817, %v817
      %v826 = vpack.c.b16 %v818, %v818
      %v827 = vpack.c.b16 %v819, %v819
      %v828 = vpack.c.b16 %v820, %v820
      %v829 = vpack.c.b16 %v821, %v821
      %v830 = vpack.c.b16 %v822, %v822
      %831 = vrot.lane.b32.xlu0 %v823, 28
      %v832 = vpop.permute.xlu0 %831
      %833 = vrot.lane.b32.xlu0 %v824, 28
      %v834 = vpop.permute.xlu0 %833
      %835 = vrot.lane.b32.xlu0 %v825, 28
      %v836 = vpop.permute.xlu0 %835
      %837 = vrot.lane.b32.xlu0 %v826, 28
      %v838 = vpop.permute.xlu0 %837
      %839 = vrot.lane.b32.xlu0 %v827, 28
      %v840 = vpop.permute.xlu0 %839
      %841 = vrot.lane.b32.xlu0 %v828, 28
      %v842 = vpop.permute.xlu0 %841
      %843 = vrot.lane.b32.xlu0 %v829, 28
      %v844 = vpop.permute.xlu0 %843
      %845 = vrot.lane.b32.xlu0 %v830, 28
      %v846 = vpop.permute.xlu0 %845
      %vm855 = vcmask 257248
      %856 = vst.msk [vmem:[#allocation3] sm:$0xf] %vm855, %v832
      %857 = vst.msk [vmem:[#allocation3 + $0x4] sm:$0xf] %vm855, %v834
      %858 = vst.msk [vmem:[#allocation3 + $0x8] sm:$0xf] %vm855, %v836
      %859 = vst.msk [vmem:[#allocation3 + $0xc] sm:$0xf] %vm855, %v838
      %860 = vst.msk [vmem:[#allocation3 + $0x10] sm:$0xf] %vm855, %v840
      %861 = vst.msk [vmem:[#allocation3 + $0x14] sm:$0xf] %vm855, %v842
      %862 = vst.msk [vmem:[#allocation3 + $0x18] sm:$0xf] %vm855, %v844
      %863 = vst.msk [vmem:[#allocation3 + $0x1c] sm:$0xf] %vm855, %v846
      %v864 = vld [vmem:[%s717 + $0x2] sm:$0xff]
      %v865 = vld [vmem:[%s717 + $0x12] sm:$0xff]
      %v866 = vld [vmem:[%s717 + $0x22] sm:$0xff]
      %v867 = vld [vmem:[%s717 + $0x32] sm:$0xff]
      %v868 = vld [vmem:[%s717 + $0x42] sm:$0xff]
      %v869 = vld [vmem:[%s717 + $0x52] sm:$0xff]
      %v870 = vld [vmem:[%s717 + $0x62] sm:$0xff]
      %v871 = vld [vmem:[%s717 + $0x72] sm:$0xff]
      %v872 = vpack.c.bf16 %v864, %v864
      %v873 = vpack.c.bf16 %v865, %v865
      %v874 = vpack.c.bf16 %v866, %v866
      %v875 = vpack.c.bf16 %v867, %v867
      %v876 = vpack.c.bf16 %v868, %v868
      %v877 = vpack.c.bf16 %v869, %v869
      %v878 = vpack.c.bf16 %v870, %v870
      %v879 = vpack.c.bf16 %v871, %v871
      %v888 = vunpack.c.l.b16 %v872
      %v889 = vunpack.c.l.b16 %v873
      %v890 = vunpack.c.l.b16 %v874
      %v891 = vunpack.c.l.b16 %v875
      %v892 = vunpack.c.l.b16 %v876
      %v893 = vunpack.c.l.b16 %v877
      %v894 = vunpack.c.l.b16 %v878
      %v895 = vunpack.c.l.b16 %v879
      %v896 = vpack.c.b16 %v888, %v888
      %v897 = vpack.c.b16 %v889, %v889
      %v898 = vpack.c.b16 %v890, %v890
      %v899 = vpack.c.b16 %v891, %v891
      %v900 = vpack.c.b16 %v892, %v892
      %v901 = vpack.c.b16 %v893, %v893
      %v902 = vpack.c.b16 %v894, %v894
      %v903 = vpack.c.b16 %v895, %v895
      %904 = vrot.lane.b32.xlu0 %v896, 32
      %v905 = vpop.permute.xlu0 %904
      %906 = vrot.lane.b32.xlu0 %v897, 32
      %v907 = vpop.permute.xlu0 %906
      %908 = vrot.lane.b32.xlu0 %v898, 32
      %v909 = vpop.permute.xlu0 %908
      %910 = vrot.lane.b32.xlu0 %v899, 32
      %v911 = vpop.permute.xlu0 %910
      %912 = vrot.lane.b32.xlu0 %v900, 32
      %v913 = vpop.permute.xlu0 %912
      %914 = vrot.lane.b32.xlu0 %v901, 32
      %v915 = vpop.permute.xlu0 %914
      %916 = vrot.lane.b32.xlu0 %v902, 32
      %v917 = vpop.permute.xlu0 %916
      %918 = vrot.lane.b32.xlu0 %v903, 32
      %v919 = vpop.permute.xlu0 %918
      %vm928 = vcmask 290048
      %929 = vst.msk [vmem:[#allocation3] sm:$0xf] %vm928, %v905
      %930 = vst.msk [vmem:[#allocation3 + $0x4] sm:$0xf] %vm928, %v907
      %931 = vst.msk [vmem:[#allocation3 + $0x8] sm:$0xf] %vm928, %v909
      %932 = vst.msk [vmem:[#allocation3 + $0xc] sm:$0xf] %vm928, %v911
      %933 = vst.msk [vmem:[#allocation3 + $0x10] sm:$0xf] %vm928, %v913
      %934 = vst.msk [vmem:[#allocation3 + $0x14] sm:$0xf] %vm928, %v915
      %935 = vst.msk [vmem:[#allocation3 + $0x18] sm:$0xf] %vm928, %v917
      %936 = vst.msk [vmem:[#allocation3 + $0x1c] sm:$0xf] %vm928, %v919
      %v937 = vld [vmem:[#allocation3] sm:$0xf]
      %v938 = vld [vmem:[#allocation3 + $0x4] sm:$0xf]
      %v939 = vld [vmem:[#allocation3 + $0x8] sm:$0xf]
      %v940 = vld [vmem:[#allocation3 + $0xc] sm:$0xf]
      %v941 = vld [vmem:[#allocation3 + $0x10] sm:$0xf]
      %v942 = vld [vmem:[#allocation3 + $0x14] sm:$0xf]
      %v943 = vld [vmem:[#allocation3 + $0x18] sm:$0xf]
      %v944 = vld [vmem:[#allocation3 + $0x1c] sm:$0xf]
      %v945 = vld [vmem:[%s1] sm:$0xf]
      %v946 = vld [vmem:[%s1 + $0x4] sm:$0xf]
      %v947 = vld [vmem:[%s1 + $0x8] sm:$0xf]
      %v948 = vld [vmem:[%s1 + $0xc] sm:$0xf]
      %v949 = vld [vmem:[%s1 + $0x10] sm:$0x3]
      %v950 = vld [vmem:[%s2] sm:$0x1]
      %v952 = vlaneseq
      %v953 = vshrl.u32 %v952, 7
      %v954 = vsub.s32 0, %v953
      %v955 = vrot.slane %v950, %v954
      %v965 = vunpack.c.l.b16 %v937
      %v966 = vunpack.c.l.b16 %v938
      %v967 = vunpack.c.l.b16 %v939
      %v968 = vunpack.c.l.b16 %v940
      %v969 = vunpack.c.l.b16 %v941
      %v970 = vunpack.c.l.b16 %v942
      %v971 = vunpack.c.l.b16 %v943
      %v972 = vunpack.c.l.b16 %v944
      %v973 = vpack.c.b16 %v966, %v965
      %v974 = vpack.c.b16 %v968, %v967
      %v975 = vpack.c.b16 %v970, %v969
      %v976 = vpack.c.b16 %v972, %v971
      %v982 = vunpack.c.l.b16 %v945
      %v983 = vunpack.c.l.b16 %v946
      %v984 = vunpack.c.l.b16 %v947
      %v985 = vunpack.c.l.b16 %v948
      %v986 = vunpack.c.l.b16 %v949
      %v987 = vpack.c.b16 %v983, %v982
      %v988 = vpack.c.b16 %v985, %v984
      %v989 = vpack.c.b16 %v986, %v986
      %vm992 = vcmask 293888
      %v994 = vsel %vm992, %v973, 0
      %v997 = vsel %vm992, %v974, 0
      %v1000 = vsel %vm992, %v975, 0
      %v1003 = vsel %vm992, %v976, 0
      %vm1005 = vcmask 1041408
      %v1007 = vsel %vm1005, %v989, 0
      %1009 = vmatprep.subr.bf16.mxu0 0
      %1010 = vmatpush1.bf16.msra.mxu0 %v987
      %1011 = vmatprep.subr.bf16.mxu0 0
      %1012 = vmatpush1.bf16.msra.mxu0 %v988
      %1013 = vmatprep.subr.bf16.mxu0 0
      %1014 = vmatpush1.bf16.msra.mxu0 %v1007
      %1015 = vmatprep.subr.bf16.mxu0 0
      %1016 = vmatpush1.bf16.msra.mxu0 0
      %1017 = vmatprep.subr.bf16.mxu0 0
      %1018 = vmatpush1.bf16.msra.mxu0 0
      %1019 = vmatprep.subr.bf16.mxu0 0
      %1020 = vmatpush1.bf16.msra.mxu0 0
      %1021 = vmatprep.subr.bf16.mxu0 0
      %1022 = vmatpush1.bf16.msra.mxu0 0
      %1023 = vmatprep.subr.bf16.mxu0 0
      %1024 = vmatpush1.bf16.msra.mxu0 0
      %1025 = vmatprep.subr.bf16.mxu0 0
      %1026 = vmatpush1.bf16.msra.mxu0 0
      %1027 = vmatprep.subr.bf16.mxu0 0
      %1028 = vmatpush1.bf16.msra.mxu0 0
      %1029 = vmatprep.subr.bf16.mxu0 0
      %1030 = vmatpush1.bf16.msra.mxu0 0
      %1031 = vmatprep.subr.bf16.mxu0 0
      %1032 = vmatpush1.bf16.msra.mxu0 0
      %1033 = vmatprep.subr.bf16.mxu0 0
      %1034 = vmatpush1.bf16.msra.mxu0 0
      %1035 = vmatprep.subr.bf16.mxu0 0
      %1036 = vmatpush1.bf16.msra.mxu0 0
      %1037 = vmatprep.subr.bf16.mxu0 0
      %1038 = vmatpush1.bf16.msra.mxu0 0
      %1039 = vmatprep.subr.bf16.mxu0 0
      %1040 = vmatpush1.bf16.msra.mxu0 0
      %1041 = vmatprep.mubr.bf16.mxu0 0
      %1042 = vmatmul.mubr.bf16.gmra.mrb[0].mxu0 %v994
      %v1043 = vpop.f32.mrb[0].mxu0
      %v1044 = vadd.f32 %v955, %v1043
      %v1045 = vpop.f32.mrb[0].mxu0
      %v1046 = vpop.f32.mrb[0].mxu0
      %v1047 = vadd.f32 %v955, %v1046
      %v1048 = vpop.f32.mrb[0].mxu0
      %1049 = vmatprep.mubr.bf16.mxu0 0
      %1050 = vmatmul.mubr.bf16.gmra.mrb[0].mxu0 %v997
      %v1051 = vpop.f32.mrb[0].mxu0
      %v1052 = vadd.f32 %v955, %v1051
      %v1053 = vpop.f32.mrb[0].mxu0
      %v1054 = vpop.f32.mrb[0].mxu0
      %v1055 = vadd.f32 %v955, %v1054
      %v1056 = vpop.f32.mrb[0].mxu0
      %1057 = vmatprep.mubr.bf16.mxu0 0
      %1058 = vmatmul.mubr.bf16.gmra.mrb[0].mxu0 %v1000
      %v1059 = vpop.f32.mrb[0].mxu0
      %v1060 = vadd.f32 %v955, %v1059
      %v1061 = vpop.f32.mrb[0].mxu0
      %v1062 = vpop.f32.mrb[0].mxu0
      %v1063 = vadd.f32 %v955, %v1062
      %v1064 = vpop.f32.mrb[0].mxu0
      %1065 = vmatprep.mubr.bf16.mxu0 0
      %1066 = vmatmul.mubr.bf16.gmra.mrb[0].mxu0 %v1003
      %v1067 = vpop.f32.mrb[0].mxu0
      %v1068 = vadd.f32 %v955, %v1067
      %v1069 = vpop.f32.mrb[0].mxu0
      %v1070 = vpop.f32.mrb[0].mxu0
      %v1071 = vadd.f32 %v955, %v1070
      %v1072 = vpop.f32.mrb[0].mxu0
      %1073 = vdwg.mxu0
      %v1074 = vmax.f32 %v1044, 0.0
      %v1075 = vmax.f32 %v1047, 0.0
      %v1076 = vmax.f32 %v1052, 0.0
      %v1077 = vmax.f32 %v1055, 0.0
      %v1078 = vmax.f32 %v1060, 0.0
      %v1079 = vmax.f32 %v1063, 0.0
      %v1080 = vmax.f32 %v1068, 0.0
      %v1081 = vmax.f32 %v1071, 0.0
      %vm1082 = vcmask 64512
      %1083 = vst.msk [vmem:[#allocation4] sm:$0xff] %vm1082, 0.0
      %vm1084 = vcmask 58368
      %1085 = vst.msk [vmem:[#allocation4 + $0x8] sm:$0x3] %vm1084, 0.0
      %s1086 = scalar_lea.vmem [#allocation4], 144
      %1087 = vst.msk [vmem:[%s1086] sm:$0xff] %vm1082, 0.0
      %1088 = vst.msk [vmem:[%s1086 + $0x8] sm:$0x3] %vm1084, 0.0
      %vm1089 = vcmask 57344
      %1090 = vst.msk [vmem:[#allocation4] sm:$0x1] %vm1089, 0.0
      %1091 = vst.msk [vmem:[#allocation4 + $0x10] sm:$0x1] %vm1089, 0.0
      %1092 = vst.msk [vmem:[#allocation4 + $0x20] sm:$0x1] %vm1089, 0.0
      %1093 = vst.msk [vmem:[#allocation4 + $0x30] sm:$0x1] %vm1089, 0.0
      %1094 = vst.msk [vmem:[#allocation4 + $0x40] sm:$0x1] %vm1089, 0.0
      %1095 = vst.msk [vmem:[#allocation4 + $0x50] sm:$0x1] %vm1089, 0.0
      %1096 = vst.msk [vmem:[#allocation4 + $0x60] sm:$0x1] %vm1089, 0.0
      %1097 = vst.msk [vmem:[#allocation4 + $0x70] sm:$0x1] %vm1089, 0.0
      %1098 = vst.msk [vmem:[#allocation4 + $0x80] sm:$0x1] %vm1089, 0.0
      %1099 = vst.msk [vmem:[#allocation4 + $0x90] sm:$0x1] %vm1089, 0.0
      %1100 = vst.msk [vmem:[#allocation4 + $0x9] sm:$0x1] %vm1089, 0.0
      %1101 = vst.msk [vmem:[#allocation4 + $0x19] sm:$0x1] %vm1089, 0.0
      %1102 = vst.msk [vmem:[#allocation4 + $0x29] sm:$0x1] %vm1089, 0.0
      %1103 = vst.msk [vmem:[#allocation4 + $0x39] sm:$0x1] %vm1089, 0.0
      %1104 = vst.msk [vmem:[#allocation4 + $0x49] sm:$0x1] %vm1089, 0.0
      %1105 = vst.msk [vmem:[#allocation4 + $0x59] sm:$0x1] %vm1089, 0.0
      %1106 = vst.msk [vmem:[#allocation4 + $0x69] sm:$0x1] %vm1089, 0.0
      %1107 = vst.msk [vmem:[#allocation4 + $0x79] sm:$0x1] %vm1089, 0.0
      %1108 = vst.msk [vmem:[#allocation4 + $0x89] sm:$0x1] %vm1089, 0.0
      %1109 = vst.msk [vmem:[#allocation4 + $0x99] sm:$0x1] %vm1089, 0.0
      %s1110 = scalar_lea.vmem [#allocation4], 16
      %1111 = vst.msk [vmem:[%s1110 + $0x1] sm:$0xff] %vm1082, %v1074
      %1112 = vst.msk [vmem:[%s1110 + $0x11] sm:$0xff] %vm1082, %v1075
      %1113 = vst.msk [vmem:[%s1110 + $0x21] sm:$0xff] %vm1082, %v1076
      %1114 = vst.msk [vmem:[%s1110 + $0x31] sm:$0xff] %vm1082, %v1077
      %1115 = vst.msk [vmem:[%s1110 + $0x41] sm:$0xff] %vm1082, %v1078
      %1116 = vst.msk [vmem:[%s1110 + $0x51] sm:$0xff] %vm1082, %v1079
      %1117 = vst.msk [vmem:[%s1110 + $0x61] sm:$0xff] %vm1082, %v1080
      %1118 = vst.msk [vmem:[%s1110 + $0x71] sm:$0xff] %vm1082, %v1081
      %v1119 = vld [vmem:[#allocation4] sm:$0xff]
      %v1120 = vld [vmem:[#allocation4 + $0x10] sm:$0xff]
      %v1121 = vld [vmem:[#allocation4 + $0x20] sm:$0xff]
      %v1122 = vld [vmem:[#allocation4 + $0x30] sm:$0xff]
      %v1123 = vld [vmem:[#allocation4 + $0x40] sm:$0xff]
      %v1124 = vld [vmem:[#allocation4 + $0x50] sm:$0xff]
      %v1125 = vld [vmem:[#allocation4 + $0x60] sm:$0xff]
      %v1126 = vld [vmem:[#allocation4 + $0x70] sm:$0xff]
      %v1127 = vpack.c.bf16 %v1119, %v1119
      %v1128 = vpack.c.bf16 %v1120, %v1120
      %v1129 = vpack.c.bf16 %v1121, %v1121
      %v1130 = vpack.c.bf16 %v1122, %v1122
      %v1131 = vpack.c.bf16 %v1123, %v1123
      %v1132 = vpack.c.bf16 %v1124, %v1124
      %v1133 = vpack.c.bf16 %v1125, %v1125
      %v1134 = vpack.c.bf16 %v1126, %v1126
      %vm1135 = vcmask 60416
      %1136 = vst.msk [vmem:[#allocation5] sm:$0xf] %vm1135, %v1127
      %1137 = vst.msk [vmem:[#allocation5 + $0x4] sm:$0xf] %vm1135, %v1128
      %1138 = vst.msk [vmem:[#allocation5 + $0x8] sm:$0xf] %vm1135, %v1129
      %1139 = vst.msk [vmem:[#allocation5 + $0xc] sm:$0xf] %vm1135, %v1130
      %1140 = vst.msk [vmem:[#allocation5 + $0x10] sm:$0xf] %vm1135, %v1131
      %1141 = vst.msk [vmem:[#allocation5 + $0x14] sm:$0xf] %vm1135, %v1132
      %1142 = vst.msk [vmem:[#allocation5 + $0x18] sm:$0xf] %vm1135, %v1133
      %1143 = vst.msk [vmem:[#allocation5 + $0x1c] sm:$0xf] %vm1135, %v1134
      %v1144 = vld [vmem:[#allocation4 + $0x1] sm:$0xff]
      %v1145 = vld [vmem:[#allocation4 + $0x11] sm:$0xff]
      %v1146 = vld [vmem:[#allocation4 + $0x21] sm:$0xff]
      %v1147 = vld [vmem:[#allocation4 + $0x31] sm:$0xff]
      %v1148 = vld [vmem:[#allocation4 + $0x41] sm:$0xff]
      %v1149 = vld [vmem:[#allocation4 + $0x51] sm:$0xff]
      %v1150 = vld [vmem:[#allocation4 + $0x61] sm:$0xff]
      %v1151 = vld [vmem:[#allocation4 + $0x71] sm:$0xff]
      %v1152 = vpack.c.bf16 %v1144, %v1144
      %v1153 = vpack.c.bf16 %v1145, %v1145
      %v1154 = vpack.c.bf16 %v1146, %v1146
      %v1155 = vpack.c.bf16 %v1147, %v1147
      %v1156 = vpack.c.bf16 %v1148, %v1148
      %v1157 = vpack.c.bf16 %v1149, %v1149
      %v1158 = vpack.c.bf16 %v1150, %v1150
      %v1159 = vpack.c.bf16 %v1151, %v1151
      %v1168 = vunpack.c.l.b16 %v1152
      %v1169 = vunpack.c.l.b16 %v1153
      %v1170 = vunpack.c.l.b16 %v1154
      %v1171 = vunpack.c.l.b16 %v1155
      %v1172 = vunpack.c.l.b16 %v1156
      %v1173 = vunpack.c.l.b16 %v1157
      %v1174 = vunpack.c.l.b16 %v1158
      %v1175 = vunpack.c.l.b16 %v1159
      %v1176 = vpack.c.b16 %v1168, %v1168
      %v1177 = vpack.c.b16 %v1169, %v1169
      %v1178 = vpack.c.b16 %v1170, %v1170
      %v1179 = vpack.c.b16 %v1171, %v1171
      %v1180 = vpack.c.b16 %v1172, %v1172
      %v1181 = vpack.c.b16 %v1173, %v1173
      %v1182 = vpack.c.b16 %v1174, %v1174
      %v1183 = vpack.c.b16 %v1175, %v1175
      %1184 = vrot.lane.b32.xlu0 %v1176, 8
      %v1185 = vpop.permute.xlu0 %1184
      %1186 = vrot.lane.b32.xlu0 %v1177, 8
      %v1187 = vpop.permute.xlu0 %1186
      %1188 = vrot.lane.b32.xlu0 %v1178, 8
      %v1189 = vpop.permute.xlu0 %1188
      %1190 = vrot.lane.b32.xlu0 %v1179, 8
      %v1191 = vpop.permute.xlu0 %1190
      %1192 = vrot.lane.b32.xlu0 %v1180, 8
      %v1193 = vpop.permute.xlu0 %1192
      %1194 = vrot.lane.b32.xlu0 %v1181, 8
      %v1195 = vpop.permute.xlu0 %1194
      %1196 = vrot.lane.b32.xlu0 %v1182, 8
      %v1197 = vpop.permute.xlu0 %1196
      %1198 = vrot.lane.b32.xlu0 %v1183, 8
      %v1199 = vpop.permute.xlu0 %1198
      %vm1208 = vcmask 126016
      %1209 = vst.msk [vmem:[#allocation5] sm:$0xf] %vm1208, %v1185
      %1210 = vst.msk [vmem:[#allocation5 + $0x4] sm:$0xf] %vm1208, %v1187
      %1211 = vst.msk [vmem:[#allocation5 + $0x8] sm:$0xf] %vm1208, %v1189
      %1212 = vst.msk [vmem:[#allocation5 + $0xc] sm:$0xf] %vm1208, %v1191
      %1213 = vst.msk [vmem:[#allocation5 + $0x10] sm:$0xf] %vm1208, %v1193
      %1214 = vst.msk [vmem:[#allocation5 + $0x14] sm:$0xf] %vm1208, %v1195
      %1215 = vst.msk [vmem:[#allocation5 + $0x18] sm:$0xf] %vm1208, %v1197
      %1216 = vst.msk [vmem:[#allocation5 + $0x1c] sm:$0xf] %vm1208, %v1199
      %v1217 = vld [vmem:[#allocation4 + $0x2] sm:$0xff]
      %v1218 = vld [vmem:[#allocation4 + $0x12] sm:$0xff]
      %v1219 = vld [vmem:[#allocation4 + $0x22] sm:$0xff]
      %v1220 = vld [vmem:[#allocation4 + $0x32] sm:$0xff]
      %v1221 = vld [vmem:[#allocation4 + $0x42] sm:$0xff]
      %v1222 = vld [vmem:[#allocation4 + $0x52] sm:$0xff]
      %v1223 = vld [vmem:[#allocation4 + $0x62] sm:$0xff]
      %v1224 = vld [vmem:[#allocation4 + $0x72] sm:$0xff]
      %v1225 = vpack.c.bf16 %v1217, %v1217
      %v1226 = vpack.c.bf16 %v1218, %v1218
      %v1227 = vpack.c.bf16 %v1219, %v1219
      %v1228 = vpack.c.bf16 %v1220, %v1220
      %v1229 = vpack.c.bf16 %v1221, %v1221
      %v1230 = vpack.c.bf16 %v1222, %v1222
      %v1231 = vpack.c.bf16 %v1223, %v1223
      %v1232 = vpack.c.bf16 %v1224, %v1224
      %v1241 = vunpack.c.l.b16 %v1225
      %v1242 = vunpack.c.l.b16 %v1226
      %v1243 = vunpack.c.l.b16 %v1227
      %v1244 = vunpack.c.l.b16 %v1228
      %v1245 = vunpack.c.l.b16 %v1229
      %v1246 = vunpack.c.l.b16 %v1230
      %v1247 = vunpack.c.l.b16 %v1231
      %v1248 = vunpack.c.l.b16 %v1232
      %v1249 = vpack.c.b16 %v1241, %v1241
      %v1250 = vpack.c.b16 %v1242, %v1242
      %v1251 = vpack.c.b16 %v1243, %v1243
      %v1252 = vpack.c.b16 %v1244, %v1244
      %v1253 = vpack.c.b16 %v1245, %v1245
      %v1254 = vpack.c.b16 %v1246, %v1246
      %v1255 = vpack.c.b16 %v1247, %v1247
      %v1256 = vpack.c.b16 %v1248, %v1248
      %1257 = vrot.lane.b32.xlu0 %v1249, 16
      %v1258 = vpop.permute.xlu0 %1257
      %1259 = vrot.lane.b32.xlu0 %v1250, 16
      %v1260 = vpop.permute.xlu0 %1259
      %1261 = vrot.lane.b32.xlu0 %v1251, 16
      %v1262 = vpop.permute.xlu0 %1261
      %1263 = vrot.lane.b32.xlu0 %v1252, 16
      %v1264 = vpop.permute.xlu0 %1263
      %1265 = vrot.lane.b32.xlu0 %v1253, 16
      %v1266 = vpop.permute.xlu0 %1265
      %1267 = vrot.lane.b32.xlu0 %v1254, 16
      %v1268 = vpop.permute.xlu0 %1267
      %1269 = vrot.lane.b32.xlu0 %v1255, 16
      %v1270 = vpop.permute.xlu0 %1269
      %1271 = vrot.lane.b32.xlu0 %v1256, 16
      %v1272 = vpop.permute.xlu0 %1271
      %vm1281 = vcmask 191616
      %1282 = vst.msk [vmem:[#allocation5] sm:$0xf] %vm1281, %v1258
      %1283 = vst.msk [vmem:[#allocation5 + $0x4] sm:$0xf] %vm1281, %v1260
      %1284 = vst.msk [vmem:[#allocation5 + $0x8] sm:$0xf] %vm1281, %v1262
      %1285 = vst.msk [vmem:[#allocation5 + $0xc] sm:$0xf] %vm1281, %v1264
      %1286 = vst.msk [vmem:[#allocation5 + $0x10] sm:$0xf] %vm1281, %v1266
      %1287 = vst.msk [vmem:[#allocation5 + $0x14] sm:$0xf] %vm1281, %v1268
      %1288 = vst.msk [vmem:[#allocation5 + $0x18] sm:$0xf] %vm1281, %v1270
      %1289 = vst.msk [vmem:[#allocation5 + $0x1c] sm:$0xf] %vm1281, %v1272
      %v1290 = vld [vmem:[%s1110] sm:$0xff]
      %v1291 = vld [vmem:[%s1110 + $0x10] sm:$0xff]
      %v1292 = vld [vmem:[%s1110 + $0x20] sm:$0xff]
      %v1293 = vld [vmem:[%s1110 + $0x30] sm:$0xff]
      %v1294 = vld [vmem:[%s1110 + $0x40] sm:$0xff]
      %v1295 = vld [vmem:[%s1110 + $0x50] sm:$0xff]
      %v1296 = vld [vmem:[%s1110 + $0x60] sm:$0xff]
      %v1297 = vld [vmem:[%s1110 + $0x70] sm:$0xff]
      %v1298 = vpack.c.bf16 %v1290, %v1290
      %v1299 = vpack.c.bf16 %v1291, %v1291
      %v1300 = vpack.c.bf16 %v1292, %v1292
      %v1301 = vpack.c.bf16 %v1293, %v1293
      %v1302 = vpack.c.bf16 %v1294, %v1294
      %v1303 = vpack.c.bf16 %v1295, %v1295
      %v1304 = vpack.c.bf16 %v1296, %v1296
      %v1305 = vpack.c.bf16 %v1297, %v1297
      %v1314 = vunpack.c.l.b16 %v1298
      %v1315 = vunpack.c.l.b16 %v1299
      %v1316 = vunpack.c.l.b16 %v1300
      %v1317 = vunpack.c.l.b16 %v1301
      %v1318 = vunpack.c.l.b16 %v1302
      %v1319 = vunpack.c.l.b16 %v1303
      %v1320 = vunpack.c.l.b16 %v1304
      %v1321 = vunpack.c.l.b16 %v1305
      %v1322 = vpack.c.b16 %v1314, %v1314
      %v1323 = vpack.c.b16 %v1315, %v1315
      %v1324 = vpack.c.b16 %v1316, %v1316
      %v1325 = vpack.c.b16 %v1317, %v1317
      %v1326 = vpack.c.b16 %v1318, %v1318
      %v1327 = vpack.c.b16 %v1319, %v1319
      %v1328 = vpack.c.b16 %v1320, %v1320
      %v1329 = vpack.c.b16 %v1321, %v1321
      %1330 = vrot.lane.b32.xlu0 %v1322, 24
      %v1331 = vpop.permute.xlu0 %1330
      %1332 = vrot.lane.b32.xlu0 %v1323, 24
      %v1333 = vpop.permute.xlu0 %1332
      %1334 = vrot.lane.b32.xlu0 %v1324, 24
      %v1335 = vpop.permute.xlu0 %1334
      %1336 = vrot.lane.b32.xlu0 %v1325, 24
      %v1337 = vpop.permute.xlu0 %1336
      %1338 = vrot.lane.b32.xlu0 %v1326, 24
      %v1339 = vpop.permute.xlu0 %1338
      %1340 = vrot.lane.b32.xlu0 %v1327, 24
      %v1341 = vpop.permute.xlu0 %1340
      %1342 = vrot.lane.b32.xlu0 %v1328, 24
      %v1343 = vpop.permute.xlu0 %1342
      %1344 = vrot.lane.b32.xlu0 %v1329, 24
      %v1345 = vpop.permute.xlu0 %1344
      %vm1354 = vcmask 257216
      %1355 = vst.msk [vmem:[#allocation5] sm:$0xf] %vm1354, %v1331
      %1356 = vst.msk [vmem:[#allocation5 + $0x4] sm:$0xf] %vm1354, %v1333
      %1357 = vst.msk [vmem:[#allocation5 + $0x8] sm:$0xf] %vm1354, %v1335
      %1358 = vst.msk [vmem:[#allocation5 + $0xc] sm:$0xf] %vm1354, %v1337
      %1359 = vst.msk [vmem:[#allocation5 + $0x10] sm:$0xf] %vm1354, %v1339
      %1360 = vst.msk [vmem:[#allocation5 + $0x14] sm:$0xf] %vm1354, %v1341
      %1361 = vst.msk [vmem:[#allocation5 + $0x18] sm:$0xf] %vm1354, %v1343
      %1362 = vst.msk [vmem:[#allocation5 + $0x1c] sm:$0xf] %vm1354, %v1345
      %v1363 = vld [vmem:[%s1110 + $0x1] sm:$0xff]
      %v1364 = vld [vmem:[%s1110 + $0x11] sm:$0xff]
      %v1365 = vld [vmem:[%s1110 + $0x21] sm:$0xff]
      %v1366 = vld [vmem:[%s1110 + $0x31] sm:$0xff]
      %v1367 = vld [vmem:[%s1110 + $0x41] sm:$0xff]
      %v1368 = vld [vmem:[%s1110 + $0x51] sm:$0xff]
      %v1369 = vld [vmem:[%s1110 + $0x61] sm:$0xff]
      %v1370 = vld [vmem:[%s1110 + $0x71] sm:$0xff]
      %v1371 = vpack.c.bf16 %v1363, %v1363
      %v1372 = vpack.c.bf16 %v1364, %v1364
      %v1373 = vpack.c.bf16 %v1365, %v1365
      %v1374 = vpack.c.bf16 %v1366, %v1366
      %v1375 = vpack.c.bf16 %v1367, %v1367
      %v1376 = vpack.c.bf16 %v1368, %v1368
      %v1377 = vpack.c.bf16 %v1369, %v1369
      %v1378 = vpack.c.bf16 %v1370, %v1370
      %v1387 = vunpack.c.l.b16 %v1371
      %v1388 = vunpack.c.l.b16 %v1372
      %v1389 = vunpack.c.l.b16 %v1373
      %v1390 = vunpack.c.l.b16 %v1374
      %v1391 = vunpack.c.l.b16 %v1375
      %v1392 = vunpack.c.l.b16 %v1376
      %v1393 = vunpack.c.l.b16 %v1377
      %v1394 = vunpack.c.l.b16 %v1378
      %v1395 = vpack.c.b16 %v1387, %v1387
      %v1396 = vpack.c.b16 %v1388, %v1388
      %v1397 = vpack.c.b16 %v1389, %v1389
      %v1398 = vpack.c.b16 %v1390, %v1390
      %v1399 = vpack.c.b16 %v1391, %v1391
      %v1400 = vpack.c.b16 %v1392, %v1392
      %v1401 = vpack.c.b16 %v1393, %v1393
      %v1402 = vpack.c.b16 %v1394, %v1394
      %1403 = vrot.lane.b32.xlu0 %v1395, 32
      %v1404 = vpop.permute.xlu0 %1403
      %1405 = vrot.lane.b32.xlu0 %v1396, 32
      %v1406 = vpop.permute.xlu0 %1405
      %1407 = vrot.lane.b32.xlu0 %v1397, 32
      %v1408 = vpop.permute.xlu0 %1407
      %1409 = vrot.lane.b32.xlu0 %v1398, 32
      %v1410 = vpop.permute.xlu0 %1409
      %1411 = vrot.lane.b32.xlu0 %v1399, 32
      %v1412 = vpop.permute.xlu0 %1411
      %1413 = vrot.lane.b32.xlu0 %v1400, 32
      %v1414 = vpop.permute.xlu0 %1413
      %1415 = vrot.lane.b32.xlu0 %v1401, 32
      %v1416 = vpop.permute.xlu0 %1415
      %1417 = vrot.lane.b32.xlu0 %v1402, 32
      %v1418 = vpop.permute.xlu0 %1417
      %vm1427 = vcmask 322816
      %1428 = vst.msk [vmem:[#allocation5] sm:$0xf] %vm1427, %v1404
      %1429 = vst.msk [vmem:[#allocation5 + $0x4] sm:$0xf] %vm1427, %v1406
      %1430 = vst.msk [vmem:[#allocation5 + $0x8] sm:$0xf] %vm1427, %v1408
      %1431 = vst.msk [vmem:[#allocation5 + $0xc] sm:$0xf] %vm1427, %v1410
      %1432 = vst.msk [vmem:[#allocation5 + $0x10] sm:$0xf] %vm1427, %v1412
      %1433 = vst.msk [vmem:[#allocation5 + $0x14] sm:$0xf] %vm1427, %v1414
      %1434 = vst.msk [vmem:[#allocation5 + $0x18] sm:$0xf] %vm1427, %v1416
      %1435 = vst.msk [vmem:[#allocation5 + $0x1c] sm:$0xf] %vm1427, %v1418
      %v1436 = vld [vmem:[%s1110 + $0x2] sm:$0xff]
      %v1437 = vld [vmem:[%s1110 + $0x12] sm:$0xff]
      %v1438 = vld [vmem:[%s1110 + $0x22] sm:$0xff]
      %v1439 = vld [vmem:[%s1110 + $0x32] sm:$0xff]
      %v1440 = vld [vmem:[%s1110 + $0x42] sm:$0xff]
      %v1441 = vld [vmem:[%s1110 + $0x52] sm:$0xff]
      %v1442 = vld [vmem:[%s1110 + $0x62] sm:$0xff]
      %v1443 = vld [vmem:[%s1110 + $0x72] sm:$0xff]
      %v1444 = vpack.c.bf16 %v1436, %v1436
      %v1445 = vpack.c.bf16 %v1437, %v1437
      %v1446 = vpack.c.bf16 %v1438, %v1438
      %v1447 = vpack.c.bf16 %v1439, %v1439
      %v1448 = vpack.c.bf16 %v1440, %v1440
      %v1449 = vpack.c.bf16 %v1441, %v1441
      %v1450 = vpack.c.bf16 %v1442, %v1442
      %v1451 = vpack.c.bf16 %v1443, %v1443
      %v1460 = vunpack.c.l.b16 %v1444
      %v1461 = vunpack.c.l.b16 %v1445
      %v1462 = vunpack.c.l.b16 %v1446
      %v1463 = vunpack.c.l.b16 %v1447
      %v1464 = vunpack.c.l.b16 %v1448
      %v1465 = vunpack.c.l.b16 %v1449
      %v1466 = vunpack.c.l.b16 %v1450
      %v1467 = vunpack.c.l.b16 %v1451
      %v1468 = vpack.c.b16 %v1460, %v1460
      %v1469 = vpack.c.b16 %v1461, %v1461
      %v1470 = vpack.c.b16 %v1462, %v1462
      %v1471 = vpack.c.b16 %v1463, %v1463
      %v1472 = vpack.c.b16 %v1464, %v1464
      %v1473 = vpack.c.b16 %v1465, %v1465
      %v1474 = vpack.c.b16 %v1466, %v1466
      %v1475 = vpack.c.b16 %v1467, %v1467
      %1476 = vrot.lane.b32.xlu0 %v1468, 40
      %v1477 = vpop.permute.xlu0 %1476
      %1478 = vrot.lane.b32.xlu0 %v1469, 40
      %v1479 = vpop.permute.xlu0 %1478
      %1480 = vrot.lane.b32.xlu0 %v1470, 40
      %v1481 = vpop.permute.xlu0 %1480
      %1482 = vrot.lane.b32.xlu0 %v1471, 40
      %v1483 = vpop.permute.xlu0 %1482
      %1484 = vrot.lane.b32.xlu0 %v1472, 40
      %v1485 = vpop.permute.xlu0 %1484
      %1486 = vrot.lane.b32.xlu0 %v1473, 40
      %v1487 = vpop.permute.xlu0 %1486
      %1488 = vrot.lane.b32.xlu0 %v1474, 40
      %v1489 = vpop.permute.xlu0 %1488
      %1490 = vrot.lane.b32.xlu0 %v1475, 40
      %v1491 = vpop.permute.xlu0 %1490
      %vm1500 = vcmask 388416
      %1501 = vst.msk [vmem:[#allocation5] sm:$0xf] %vm1500, %v1477
      %1502 = vst.msk [vmem:[#allocation5 + $0x4] sm:$0xf] %vm1500, %v1479
      %1503 = vst.msk [vmem:[#allocation5 + $0x8] sm:$0xf] %vm1500, %v1481
      %1504 = vst.msk [vmem:[#allocation5 + $0xc] sm:$0xf] %vm1500, %v1483
      %1505 = vst.msk [vmem:[#allocation5 + $0x10] sm:$0xf] %vm1500, %v1485
      %1506 = vst.msk [vmem:[#allocation5 + $0x14] sm:$0xf] %vm1500, %v1487
      %1507 = vst.msk [vmem:[#allocation5 + $0x18] sm:$0xf] %vm1500, %v1489
      %1508 = vst.msk [vmem:[#allocation5 + $0x1c] sm:$0xf] %vm1500, %v1491
      %s1509 = scalar_lea.vmem [#allocation4], 32
      %v1510 = vld [vmem:[%s1509] sm:$0xff]
      %v1511 = vld [vmem:[%s1509 + $0x10] sm:$0xff]
      %v1512 = vld [vmem:[%s1509 + $0x20] sm:$0xff]
      %v1513 = vld [vmem:[%s1509 + $0x30] sm:$0xff]
      %v1514 = vld [vmem:[%s1509 + $0x40] sm:$0xff]
      %v1515 = vld [vmem:[%s1509 + $0x50] sm:$0xff]
      %v1516 = vld [vmem:[%s1509 + $0x60] sm:$0xff]
      %v1517 = vld [vmem:[%s1509 + $0x70] sm:$0xff]
      %v1518 = vpack.c.bf16 %v1510, %v1510
      %v1519 = vpack.c.bf16 %v1511, %v1511
      %v1520 = vpack.c.bf16 %v1512, %v1512
      %v1521 = vpack.c.bf16 %v1513, %v1513
      %v1522 = vpack.c.bf16 %v1514, %v1514
      %v1523 = vpack.c.bf16 %v1515, %v1515
      %v1524 = vpack.c.bf16 %v1516, %v1516
      %v1525 = vpack.c.bf16 %v1517, %v1517
      %v1534 = vunpack.c.l.b16 %v1518
      %v1535 = vunpack.c.l.b16 %v1519
      %v1536 = vunpack.c.l.b16 %v1520
      %v1537 = vunpack.c.l.b16 %v1521
      %v1538 = vunpack.c.l.b16 %v1522
      %v1539 = vunpack.c.l.b16 %v1523
      %v1540 = vunpack.c.l.b16 %v1524
      %v1541 = vunpack.c.l.b16 %v1525
      %v1542 = vpack.c.b16 %v1534, %v1534
      %v1543 = vpack.c.b16 %v1535, %v1535
      %v1544 = vpack.c.b16 %v1536, %v1536
      %v1545 = vpack.c.b16 %v1537, %v1537
      %v1546 = vpack.c.b16 %v1538, %v1538
      %v1547 = vpack.c.b16 %v1539, %v1539
      %v1548 = vpack.c.b16 %v1540, %v1540
      %v1549 = vpack.c.b16 %v1541, %v1541
      %1550 = vrot.lane.b32.xlu0 %v1542, 48
      %v1551 = vpop.permute.xlu0 %1550
      %1552 = vrot.lane.b32.xlu0 %v1543, 48
      %v1553 = vpop.permute.xlu0 %1552
      %1554 = vrot.lane.b32.xlu0 %v1544, 48
      %v1555 = vpop.permute.xlu0 %1554
      %1556 = vrot.lane.b32.xlu0 %v1545, 48
      %v1557 = vpop.permute.xlu0 %1556
      %1558 = vrot.lane.b32.xlu0 %v1546, 48
      %v1559 = vpop.permute.xlu0 %1558
      %1560 = vrot.lane.b32.xlu0 %v1547, 48
      %v1561 = vpop.permute.xlu0 %1560
      %1562 = vrot.lane.b32.xlu0 %v1548, 48
      %v1563 = vpop.permute.xlu0 %1562
      %1564 = vrot.lane.b32.xlu0 %v1549, 48
      %v1565 = vpop.permute.xlu0 %1564
      %vm1574 = vcmask 454016
      %1575 = vst.msk [vmem:[#allocation5] sm:$0xf] %vm1574, %v1551
      %1576 = vst.msk [vmem:[#allocation5 + $0x4] sm:$0xf] %vm1574, %v1553
      %1577 = vst.msk [vmem:[#allocation5 + $0x8] sm:$0xf] %vm1574, %v1555
      %1578 = vst.msk [vmem:[#allocation5 + $0xc] sm:$0xf] %vm1574, %v1557
      %1579 = vst.msk [vmem:[#allocation5 + $0x10] sm:$0xf] %vm1574, %v1559
      %1580 = vst.msk [vmem:[#allocation5 + $0x14] sm:$0xf] %vm1574, %v1561
      %1581 = vst.msk [vmem:[#allocation5 + $0x18] sm:$0xf] %vm1574, %v1563
      %1582 = vst.msk [vmem:[#allocation5 + $0x1c] sm:$0xf] %vm1574, %v1565
      %v1583 = vld [vmem:[%s1509 + $0x1] sm:$0xff]
      %v1584 = vld [vmem:[%s1509 + $0x11] sm:$0xff]
      %v1585 = vld [vmem:[%s1509 + $0x21] sm:$0xff]
      %v1586 = vld [vmem:[%s1509 + $0x31] sm:$0xff]
      %v1587 = vld [vmem:[%s1509 + $0x41] sm:$0xff]
      %v1588 = vld [vmem:[%s1509 + $0x51] sm:$0xff]
      %v1589 = vld [vmem:[%s1509 + $0x61] sm:$0xff]
      %v1590 = vld [vmem:[%s1509 + $0x71] sm:$0xff]
      %v1591 = vpack.c.bf16 %v1583, %v1583
      %v1592 = vpack.c.bf16 %v1584, %v1584
      %v1593 = vpack.c.bf16 %v1585, %v1585
      %v1594 = vpack.c.bf16 %v1586, %v1586
      %v1595 = vpack.c.bf16 %v1587, %v1587
      %v1596 = vpack.c.bf16 %v1588, %v1588
      %v1597 = vpack.c.bf16 %v1589, %v1589
      %v1598 = vpack.c.bf16 %v1590, %v1590
      %v1607 = vunpack.c.l.b16 %v1591
      %v1608 = vunpack.c.l.b16 %v1592
      %v1609 = vunpack.c.l.b16 %v1593
      %v1610 = vunpack.c.l.b16 %v1594
      %v1611 = vunpack.c.l.b16 %v1595
      %v1612 = vunpack.c.l.b16 %v1596
      %v1613 = vunpack.c.l.b16 %v1597
      %v1614 = vunpack.c.l.b16 %v1598
      %v1615 = vpack.c.b16 %v1607, %v1607
      %v1616 = vpack.c.b16 %v1608, %v1608
      %v1617 = vpack.c.b16 %v1609, %v1609
      %v1618 = vpack.c.b16 %v1610, %v1610
      %v1619 = vpack.c.b16 %v1611, %v1611
      %v1620 = vpack.c.b16 %v1612, %v1612
      %v1621 = vpack.c.b16 %v1613, %v1613
      %v1622 = vpack.c.b16 %v1614, %v1614
      %1623 = vrot.lane.b32.xlu0 %v1615, 56
      %v1624 = vpop.permute.xlu0 %1623
      %1625 = vrot.lane.b32.xlu0 %v1616, 56
      %v1626 = vpop.permute.xlu0 %1625
      %1627 = vrot.lane.b32.xlu0 %v1617, 56
      %v1628 = vpop.permute.xlu0 %1627
      %1629 = vrot.lane.b32.xlu0 %v1618, 56
      %v1630 = vpop.permute.xlu0 %1629
      %1631 = vrot.lane.b32.xlu0 %v1619, 56
      %v1632 = vpop.permute.xlu0 %1631
      %1633 = vrot.lane.b32.xlu0 %v1620, 56
      %v1634 = vpop.permute.xlu0 %1633
      %1635 = vrot.lane.b32.xlu0 %v1621, 56
      %v1636 = vpop.permute.xlu0 %1635
      %1637 = vrot.lane.b32.xlu0 %v1622, 56
      %v1638 = vpop.permute.xlu0 %1637
      %vm1647 = vcmask 519616
      %1648 = vst.msk [vmem:[#allocation5] sm:$0xf] %vm1647, %v1624
      %1649 = vst.msk [vmem:[#allocation5 + $0x4] sm:$0xf] %vm1647, %v1626
      %1650 = vst.msk [vmem:[#allocation5 + $0x8] sm:$0xf] %vm1647, %v1628
      %1651 = vst.msk [vmem:[#allocation5 + $0xc] sm:$0xf] %vm1647, %v1630
      %1652 = vst.msk [vmem:[#allocation5 + $0x10] sm:$0xf] %vm1647, %v1632
      %1653 = vst.msk [vmem:[#allocation5 + $0x14] sm:$0xf] %vm1647, %v1634
      %1654 = vst.msk [vmem:[#allocation5 + $0x18] sm:$0xf] %vm1647, %v1636
      %1655 = vst.msk [vmem:[#allocation5 + $0x1c] sm:$0xf] %vm1647, %v1638
      %v1656 = vld [vmem:[%s1509 + $0x2] sm:$0xff]
      %v1657 = vld [vmem:[%s1509 + $0x12] sm:$0xff]
      %v1658 = vld [vmem:[%s1509 + $0x22] sm:$0xff]
      %v1659 = vld [vmem:[%s1509 + $0x32] sm:$0xff]
      %v1660 = vld [vmem:[%s1509 + $0x42] sm:$0xff]
      %v1661 = vld [vmem:[%s1509 + $0x52] sm:$0xff]
      %v1662 = vld [vmem:[%s1509 + $0x62] sm:$0xff]
      %v1663 = vld [vmem:[%s1509 + $0x72] sm:$0xff]
      %v1664 = vpack.c.bf16 %v1656, %v1656
      %v1665 = vpack.c.bf16 %v1657, %v1657
      %v1666 = vpack.c.bf16 %v1658, %v1658
      %v1667 = vpack.c.bf16 %v1659, %v1659
      %v1668 = vpack.c.bf16 %v1660, %v1660
      %v1669 = vpack.c.bf16 %v1661, %v1661
      %v1670 = vpack.c.bf16 %v1662, %v1662
      %v1671 = vpack.c.bf16 %v1663, %v1663
      %v1680 = vunpack.c.l.b16 %v1664
      %v1681 = vunpack.c.l.b16 %v1665
      %v1682 = vunpack.c.l.b16 %v1666
      %v1683 = vunpack.c.l.b16 %v1667
      %v1684 = vunpack.c.l.b16 %v1668
      %v1685 = vunpack.c.l.b16 %v1669
      %v1686 = vunpack.c.l.b16 %v1670
      %v1687 = vunpack.c.l.b16 %v1671
      %v1688 = vpack.c.b16 %v1680, %v1680
      %v1689 = vpack.c.b16 %v1681, %v1681
      %v1690 = vpack.c.b16 %v1682, %v1682
      %v1691 = vpack.c.b16 %v1683, %v1683
      %v1692 = vpack.c.b16 %v1684, %v1684
      %v1693 = vpack.c.b16 %v1685, %v1685
      %v1694 = vpack.c.b16 %v1686, %v1686
      %v1695 = vpack.c.b16 %v1687, %v1687
      %1696 = vrot.lane.b32.xlu0 %v1688, 64
      %v1697 = vpop.permute.xlu0 %1696
      %1698 = vrot.lane.b32.xlu0 %v1689, 64
      %v1699 = vpop.permute.xlu0 %1698
      %1700 = vrot.lane.b32.xlu0 %v1690, 64
      %v1701 = vpop.permute.xlu0 %1700
      %1702 = vrot.lane.b32.xlu0 %v1691, 64
      %v1703 = vpop.permute.xlu0 %1702
      %1704 = vrot.lane.b32.xlu0 %v1692, 64
      %v1705 = vpop.permute.xlu0 %1704
      %1706 = vrot.lane.b32.xlu0 %v1693, 64
      %v1707 = vpop.permute.xlu0 %1706
      %1708 = vrot.lane.b32.xlu0 %v1694, 64
      %v1709 = vpop.permute.xlu0 %1708
      %1710 = vrot.lane.b32.xlu0 %v1695, 64
      %v1711 = vpop.permute.xlu0 %1710
      %vm1720 = vcmask 585216
      %1721 = vst.msk [vmem:[#allocation5] sm:$0xf] %vm1720, %v1697
      %1722 = vst.msk [vmem:[#allocation5 + $0x4] sm:$0xf] %vm1720, %v1699
      %1723 = vst.msk [vmem:[#allocation5 + $0x8] sm:$0xf] %vm1720, %v1701
      %1724 = vst.msk [vmem:[#allocation5 + $0xc] sm:$0xf] %vm1720, %v1703
      %1725 = vst.msk [vmem:[#allocation5 + $0x10] sm:$0xf] %vm1720, %v1705
      %1726 = vst.msk [vmem:[#allocation5 + $0x14] sm:$0xf] %vm1720, %v1707
      %1727 = vst.msk [vmem:[#allocation5 + $0x18] sm:$0xf] %vm1720, %v1709
      %1728 = vst.msk [vmem:[#allocation5 + $0x1c] sm:$0xf] %vm1720, %v1711
      %v1729 = vld [vmem:[#allocation5] sm:$0xf]
      %v1730 = vld [vmem:[#allocation5 + $0x4] sm:$0xf]
      %v1731 = vld [vmem:[#allocation5 + $0x8] sm:$0xf]
      %v1732 = vld [vmem:[#allocation5 + $0xc] sm:$0xf]
      %v1733 = vld [vmem:[#allocation5 + $0x10] sm:$0xf]
      %v1734 = vld [vmem:[#allocation5 + $0x14] sm:$0xf]
      %v1735 = vld [vmem:[#allocation5 + $0x18] sm:$0xf]
      %v1736 = vld [vmem:[#allocation5 + $0x1c] sm:$0xf]
      %v1737 = vld [vmem:[%s3] sm:$0xf]
      %v1738 = vld [vmem:[%s3 + $0x4] sm:$0xf]
      %v1739 = vld [vmem:[%s3 + $0x8] sm:$0xf]
      %v1740 = vld [vmem:[%s3 + $0xc] sm:$0xf]
      %v1741 = vld [vmem:[%s3 + $0x10] sm:$0xf]
      %v1742 = vld [vmem:[%s3 + $0x14] sm:$0xf]
      %v1743 = vld [vmem:[%s3 + $0x18] sm:$0xf]
      %v1744 = vld [vmem:[%s3 + $0x1c] sm:$0xf]
      %v1745 = vld [vmem:[%s3 + $0x20] sm:$0xf]
      %v1746 = vld [vmem:[%s4] sm:$0x1]
      %v1748 = vlaneseq
      %v1749 = vshrl.u32 %v1748, 7
      %v1750 = vsub.s32 0, %v1749
      %v1751 = vrot.slane %v1746, %v1750
      %v1761 = vunpack.c.l.b16 %v1729
      %v1762 = vunpack.c.l.b16 %v1730
      %v1763 = vunpack.c.l.b16 %v1731
      %v1764 = vunpack.c.l.b16 %v1732
      %v1765 = vunpack.c.l.b16 %v1733
      %v1766 = vunpack.c.l.b16 %v1734
      %v1767 = vunpack.c.l.b16 %v1735
      %v1768 = vunpack.c.l.b16 %v1736
      %v1769 = vpack.c.b16 %v1762, %v1761
      %v1770 = vpack.c.b16 %v1764, %v1763
      %v1771 = vpack.c.b16 %v1766, %v1765
      %v1772 = vpack.c.b16 %v1768, %v1767
      %v1782 = vunpack.c.l.b16 %v1737
      %v1783 = vunpack.c.l.b16 %v1738
      %v1784 = vunpack.c.l.b16 %v1739
      %v1785 = vunpack.c.l.b16 %v1740
      %v1786 = vunpack.c.l.b16 %v1741
      %v1787 = vunpack.c.l.b16 %v1742
      %v1788 = vunpack.c.l.b16 %v1743
      %v1789 = vunpack.c.l.b16 %v1744
      %v1790 = vunpack.c.l.b16 %v1745
      %v1791 = vpack.c.b16 %v1783, %v1782
      %v1792 = vpack.c.b16 %v1785, %v1784
      %v1793 = vpack.c.b16 %v1787, %v1786
      %v1794 = vpack.c.b16 %v1789, %v1788
      %v1795 = vpack.c.b16 %v1790, %v1790
      %vm1800 = vcmask 588800
      %v1802 = vsel %vm1800, %v1769, 0
      %v1805 = vsel %vm1800, %v1770, 0
      %v1808 = vsel %vm1800, %v1771, 0
      %v1811 = vsel %vm1800, %v1772, 0
      %vm1813 = vcmask 1043456
      %v1815 = vsel %vm1813, %v1795, 0
      %1817 = vmatprep.subr.bf16.mxu0 0
      %1818 = vmatpush1.bf16.msra.mxu0 %v1791
      %1819 = vmatprep.subr.bf16.mxu0 0
      %1820 = vmatpush1.bf16.msra.mxu0 %v1792
      %1821 = vmatprep.subr.bf16.mxu0 0
      %1822 = vmatpush1.bf16.msra.mxu0 %v1793
      %1823 = vmatprep.subr.bf16.mxu0 0
      %1824 = vmatpush1.bf16.msra.mxu0 %v1794
      %1825 = vmatprep.subr.bf16.mxu0 0
      %1826 = vmatpush1.bf16.msra.mxu0 %v1815
      %1827 = vmatprep.subr.bf16.mxu0 0
      %1828 = vmatpush1.bf16.msra.mxu0 0
      %1829 = vmatprep.subr.bf16.mxu0 0
      %1830 = vmatpush1.bf16.msra.mxu0 0
      %1831 = vmatprep.subr.bf16.mxu0 0
      %1832 = vmatpush1.bf16.msra.mxu0 0
      %1833 = vmatprep.subr.bf16.mxu0 0
      %1834 = vmatpush1.bf16.msra.mxu0 0
      %1835 = vmatprep.subr.bf16.mxu0 0
      %1836 = vmatpush1.bf16.msra.mxu0 0
      %1837 = vmatprep.subr.bf16.mxu0 0
      %1838 = vmatpush1.bf16.msra.mxu0 0
      %1839 = vmatprep.subr.bf16.mxu0 0
      %1840 = vmatpush1.bf16.msra.mxu0 0
      %1841 = vmatprep.subr.bf16.mxu0 0
      %1842 = vmatpush1.bf16.msra.mxu0 0
      %1843 = vmatprep.subr.bf16.mxu0 0
      %1844 = vmatpush1.bf16.msra.mxu0 0
      %1845 = vmatprep.subr.bf16.mxu0 0
      %1846 = vmatpush1.bf16.msra.mxu0 0
      %1847 = vmatprep.subr.bf16.mxu0 0
      %1848 = vmatpush1.bf16.msra.mxu0 0
      %1849 = vmatprep.mubr.bf16.mxu0 0
      %1850 = vmatmul.mubr.bf16.gmra.mrb[0].mxu0 %v1802
      %v1851 = vpop.f32.mrb[0].mxu0
      %v1852 = vadd.f32 %v1751, %v1851
      %v1853 = vpop.f32.mrb[0].mxu0
      %v1854 = vpop.f32.mrb[0].mxu0
      %v1855 = vadd.f32 %v1751, %v1854
      %v1856 = vpop.f32.mrb[0].mxu0
      %1857 = vmatprep.mubr.bf16.mxu0 0
      %1858 = vmatmul.mubr.bf16.gmra.mrb[0].mxu0 %v1805
      %v1859 = vpop.f32.mrb[0].mxu0
      %v1860 = vadd.f32 %v1751, %v1859
      %v1861 = vpop.f32.mrb[0].mxu0
      %v1862 = vpop.f32.mrb[0].mxu0
      %v1863 = vadd.f32 %v1751, %v1862
      %v1864 = vpop.f32.mrb[0].mxu0
      %1865 = vmatprep.mubr.bf16.mxu0 0
      %1866 = vmatmul.mubr.bf16.gmra.mrb[0].mxu0 %v1808
      %v1867 = vpop.f32.mrb[0].mxu0
      %v1868 = vadd.f32 %v1751, %v1867
      %v1869 = vpop.f32.mrb[0].mxu0
      %v1870 = vpop.f32.mrb[0].mxu0
      %v1871 = vadd.f32 %v1751, %v1870
      %v1872 = vpop.f32.mrb[0].mxu0
      %1873 = vmatprep.mubr.bf16.mxu0 0
      %1874 = vmatmul.mubr.bf16.gmra.mrb[0].mxu0 %v1811
      %v1875 = vpop.f32.mrb[0].mxu0
      %v1876 = vadd.f32 %v1751, %v1875
      %v1877 = vpop.f32.mrb[0].mxu0
      %v1878 = vpop.f32.mrb[0].mxu0
      %v1879 = vadd.f32 %v1751, %v1878
      %v1880 = vpop.f32.mrb[0].mxu0
      %1881 = vdwg.mxu0
      %v1882 = vmax.f32 %v1852, 0.0
      %v1883 = vmax.f32 %v1855, 0.0
      %v1884 = vmax.f32 %v1860, 0.0
      %v1885 = vmax.f32 %v1863, 0.0
      %v1886 = vmax.f32 %v1868, 0.0
      %v1887 = vmax.f32 %v1871, 0.0
      %v1888 = vmax.f32 %v1876, 0.0
      %v1889 = vmax.f32 %v1879, 0.0
      %1890 = vst.msk [vmem:[%s224] sm:$0xff] %vm1082, %v1882
      %1891 = vst.msk [vmem:[%s224 + $0x8] sm:$0xff] %vm1082, %v1883
      %1892 = vst.msk [vmem:[%s224 + $0x10] sm:$0xff] %vm1082, %v1884
      %1893 = vst.msk [vmem:[%s224 + $0x18] sm:$0xff] %vm1082, %v1885
      %1894 = vst.msk [vmem:[%s224 + $0x20] sm:$0xff] %vm1082, %v1886
      %1895 = vst.msk [vmem:[%s224 + $0x28] sm:$0xff] %vm1082, %v1887
      %1896 = vst.msk [vmem:[%s224 + $0x30] sm:$0xff] %vm1082, %v1888
      %1897 = vst.msk [vmem:[%s224 + $0x38] sm:$0xff] %vm1082, %v1889
      %p1898 = scmp.lt.s32.totalorder %s16, 1
      %s1899 = scalar_select %p1898, %s16, 1
      %s1900 = smul.addr %s1899, 8
      %s1901 = smul.addr %s1900, 8
      %s1902 = scalar_lea.vmem %s5, %s1901
      // Predicated region
      $region41: #{contracter_forward.1} parent=39 // pred_check
        %p1903 = pneg %p144
      $region42: #{contracter_forward.1} parent=39 // pred_check_branch
        %1905 = sbr.rel (%p1903) target = $region44
      $region43: #{contracter_forward.1} parent=39 // pred_region
        _
      $region44: #{contracter_forward.1} parent=39 // pred_fallthru
        _
    $region40: #{contracter_forward.1} parent=5 // pred_fallthru
      _
    %p1906 = scmp.le.s32.totalorder 2, %s11
    // Predicated region
    $region45: #{contracter_forward.1} parent=5 // pred_check
      %p1907 = pneg %p1906
    $region46: #{contracter_forward.1} parent=5 // pred_check_branch
      %1909 = sbr.rel (%p1907) target = $region48
    $region47: #{contracter_forward.1} parent=5 // pred_region
      %s1910 = ssub.s32 %s11, 2
      // Predicated region
      $region49: #{contracter_forward.1} parent=47 // pred_check
        %p1911 = pneg %p150
      $region50: #{contracter_forward.1} parent=47 // pred_check_branch
        %1913 = sbr.rel (%p1911) target = $region52
      $region51: #{contracter_forward.1} parent=47 // pred_region
        %p1914 = scmp.lt.s32.totalorder %s17, 1
        %s1915 = scalar_select %p1914, %s17, 1
        %s1916 = smul.addr %s1915, 8
        %s1917 = smul.addr %s1916, 8
        %s1918 = scalar_lea.vmem %s5, %s1917
      $region52: #{contracter_forward.1} parent=47 // pred_fallthru
        _
    $region48: #{contracter_forward.1} parent=5 // pred_fallthru
      _
  $region6: #{contracter_forward.1} parent=0 // loop_footer
    %s15 = sadd.s32 1, %s11
  $region7: #{contracter_forward.1} parent=0 // loop_footer_branch
    %10 = sbr.rel target = $region3
  $region8: #{contracter_forward.1} parent=0 // loop_exit
    _

</llo_original>
